<compile_context>
chip_gen: v7x
topology: tpu7x:2x2x1
jax: 0.10.0
libtpu: 0.0.40
codegen_flags: <defaults>
</compile_context>

<pallas_src>
import functools

import jax
import jax.numpy as jnp
from jax.experimental import pallas as pl
from jax.experimental.pallas import tpu as pltpu

LEAKY_SLOPE = 0.05   # matches F.leaky_relu(..., 0.05) in the reference model
BN_EPS = 1e-5


# ---------------------------------------------------------------------------
# Pallas kernel: fused conv-as-matmul (+bias) (+train-mode BN) (+leaky_relu)
# ---------------------------------------------------------------------------
def _conv_fused_kernel(*refs, bn, act):
    """W:(Cout,K) bf16, X:(K,Mblk) bf16, b/gamma/beta:(Cout,1) f32 -> out:(Cout,Mblk)."""
    if bn:
        w_ref, x_ref, b_ref, g_ref, bt_ref, o_ref = refs
    else:
        w_ref, x_ref, b_ref, o_ref = refs

    # MXU matmul with f32 accumulation; epilogue stays in f32.
    y = jnp.dot(w_ref[...], x_ref[...], preferred_element_type=jnp.float32)
    y = y + b_ref[...]

    if bn:
        # Single-pass per-channel stats over the lane axis (full M in this block).
        inv_m = 1.0 / y.shape[1]
        mean = jnp.sum(y, axis=1, keepdims=True) * inv_m
        msq = jnp.sum(y * y, axis=1, keepdims=True) * inv_m
        var = jnp.maximum(msq - mean * mean, 0.0)     # biased var (BN training mode)
        y = (y - mean) * jax.lax.rsqrt(var + BN_EPS) * g_ref[...] + bt_ref[...]

    if act == "leaky_relu":
        y = jnp.where(y >= 0.0, y, LEAKY_SLOPE * y)

    o_ref[...] = y.astype(o_ref.dtype)


def _pick_lane_tile(M):
    """Lane-axis tile for the no-BN layer: tile only when there is enough work,
    keeping >=2 grid steps so a 'parallel' axis can shard across v7x megacore."""
    if M >= 1024 and M % 512 == 0:
        return 512
    if M >= 512 and M % 256 == 0:
        return 256
    return M


def conv_matmul_fused(Wm, X, b, gamma=None, beta=None, *, bn, act,
                      out_dtype=jnp.bfloat16):
    """out = act(BN?(Wm @ X + b))  with Wm:(N,K), X:(K,M) -> (N,M) lane-dense."""
    N, K = Wm.shape
    K2, M = X.shape
    assert K == K2

    if bn:
        # Single-pass BN statistics need the full M axis in one block.
        bm = M
        semantics = ("arbitrary",)
    else:
        bm = _pick_lane_tile(M)
        semantics = ("parallel",)

    grid = (M // bm,)
    in_specs = [
        pl.BlockSpec((N, K), lambda i: (0, 0)),
        pl.BlockSpec((K, bm), lambda i: (0, i)),
        pl.BlockSpec((N, 1), lambda i: (0, 0)),
    ]
    args = [Wm, X, b.reshape(N, 1).astype(jnp.float32)]
    if bn:
        in_specs += [pl.BlockSpec((N, 1), lambda i: (0, 0)),
                     pl.BlockSpec((N, 1), lambda i: (0, 0))]
        args += [gamma.reshape(N, 1).astype(jnp.float32),
                 beta.reshape(N, 1).astype(jnp.float32)]

    kern = functools.partial(_conv_fused_kernel, bn=bn, act=act)
    return pl.pallas_call(
        kern,
        out_shape=jax.ShapeDtypeStruct((N, M), out_dtype),
        grid=grid,
        in_specs=in_specs,
        out_specs=pl.BlockSpec((N, bm), lambda i: (0, i)),
        compiler_params=pltpu.CompilerParams(dimension_semantics=semantics),
    )(*args)


# ---------------------------------------------------------------------------
# Glue: channel-first im2col (no activation transposes) + layer / model wiring
# ---------------------------------------------------------------------------
def im2col_cf(x_cbhw, kh, kw, stride, pad):
    """(C,B,H,W) -> X^T of shape (C*kh*kw, B*Ho*Wo); K order (Cin,kh,kw) matches
    PyTorch weight.reshape(Cout, Cin*kh*kw)."""
    if pad:
        x_cbhw = jnp.pad(x_cbhw, ((0, 0), (0, 0), (pad, pad), (pad, pad)))
    C, B, H, W = x_cbhw.shape
    Ho = (H - kh) // stride + 1
    Wo = (W - kw) // stride + 1
    cols = [x_cbhw[:, :, i:i + stride * Ho:stride, j:j + stride * Wo:stride]
            for i in range(kh) for j in range(kw)]
    p = jnp.stack(cols, axis=1)                      # (C, kh*kw, B, Ho, Wo)
    return p.reshape(C * kh * kw, B * Ho * Wo), (B, Ho, Wo)


def conv_layer(x_cbhw, params, stride, pad, bn):
    w, b = params["w"], params["b"]                  # w: (Cout, Cin, kh, kw) PyTorch layout
    c_out, c_in, kh, kw = w.shape
    X, (B, Ho, Wo) = im2col_cf(x_cbhw, kh, kw, stride, pad)
    Wm = w.reshape(c_out, c_in * kh * kw).astype(jnp.bfloat16)
    y = conv_matmul_fused(Wm, X.astype(jnp.bfloat16), b,
                          params.get("gamma"), params.get("beta"),
                          bn=bn, act="leaky_relu")
    return y.reshape(c_out, B, Ho, Wo)               # pure reshape, no transpose


def _conv_params(key, c_in, c_out, k, bn):
    kw_, kb, kg, kbt = jax.random.split(key, 4)
    p = {
        "w": 0.05 * jax.random.normal(kw_, (c_out, c_in, k, k), jnp.float32),
        "b": 0.01 * jax.random.normal(kb, (c_out,), jnp.float32),
    }
    if bn:
        p["gamma"] = 1.0 + 0.05 * jax.random.normal(kg, (c_out,), jnp.float32)
        p["beta"] = 0.05 * jax.random.normal(kbt, (c_out,), jnp.float32)
    return p


def init_params(key, image_size=32, conv_dim=8):
    k1, k2, k3, k4, k5 = jax.random.split(key, 5)
    return {
        "conv1": _conv_params(k1, 3, conv_dim, 4, bn=False),
        "conv2": _conv_params(k2, conv_dim, conv_dim * 2, 4, bn=True),
        "conv3": _conv_params(k3, conv_dim * 2, conv_dim * 4, 4, bn=True),
        "conv4": _conv_params(k4, conv_dim * 4, conv_dim * 8, 4, bn=True),
        "conv5": _conv_params(k5, conv_dim * 8, 1, image_size // 16, bn=False),
    }


def discriminator_forward(params, x_nchw):
    # NCHW -> (C, B, H, W): one tiny transpose of the 3-channel input only.
    x = jnp.transpose(x_nchw, (1, 0, 2, 3)).astype(jnp.bfloat16)
    out = conv_layer(x,   params["conv1"], stride=2, pad=1, bn=False)
    out = conv_layer(out, params["conv2"], stride=2, pad=1, bn=True)
    out = conv_layer(out, params["conv3"], stride=2, pad=1, bn=True)
    out = conv_layer(out, params["conv4"], stride=2, pad=1, bn=True)
    # conv5: (1, C4*k*k) @ (C4*k*k, B) ~500 FLOPs — kernel-launch overhead
    # exceeds the work, so keep it in plain jnp.
    w5, b5 = params["conv5"]["w"], params["conv5"]["b"]
    k5 = w5.shape[-1]
    X5, _ = im2col_cf(out, k5, k5, stride=1, pad=0)          # (C4*k5*k5, B)
    logits = jnp.dot(w5.reshape(1, -1), X5.astype(jnp.float32),
                     preferred_element_type=jnp.float32) + b5.reshape(1, 1)
    return jnp.squeeze(jax.nn.sigmoid(logits))               # (B,), like torch .squeeze()


# ---------------------------------------------------------------------------
# Pure-JAX reference (f32, lax.conv) to validate the fused Pallas pipeline
# ---------------------------------------------------------------------------
def reference_forward(params, x_nchw):
    def conv2d(x, w, b, stride, pad):
        y = jax.lax.conv_general_dilated(
            x, w, (stride, stride), [(pad, pad), (pad, pad)],
            dimension_numbers=("NCHW", "OIHW", "NCHW"))
        return y + b.reshape(1, -1, 1, 1)

    def bn(y, gamma, beta):
        mean = y.mean(axis=(0, 2, 3), keepdims=True)
        var = y.var(axis=(0, 2, 3), keepdims=True)           # biased, train-mode BN
        return ((y - mean) * jax.lax.rsqrt(var + BN_EPS)
                * gamma.reshape(1, -1, 1, 1) + beta.reshape(1, -1, 1, 1))

    def lrelu(y):
        return jnp.where(y >= 0.0, y, LEAKY_SLOPE * y)

    p = params
    x = x_nchw.astype(jnp.float32)
    out = lrelu(conv2d(x, p["conv1"]["w"], p["conv1"]["b"], 2, 1))
    out = lrelu(bn(conv2d(out, p["conv2"]["w"], p["conv2"]["b"], 2, 1),
                   p["conv2"]["gamma"], p["conv2"]["beta"]))
    out = lrelu(bn(conv2d(out, p["conv3"]["w"], p["conv3"]["b"], 2, 1),
                   p["conv3"]["gamma"], p["conv3"]["beta"]))
    out = lrelu(bn(conv2d(out, p["conv4"]["w"], p["conv4"]["b"], 2, 1),
                   p["conv4"]["gamma"], p["conv4"]["beta"]))
    logits = conv2d(out, p["conv5"]["w"], p["conv5"]["b"], 1, 0)
    return jnp.squeeze(jax.nn.sigmoid(logits))


if __name__ == "__main__":
    image_size, conv_dim, batch = 32, 8, 2   # small shapes; conv5 kernel = 32/16 = 2
    key = jax.random.PRNGKey(0)
    kp, kx = jax.random.split(key)
    params = init_params(kp, image_size=image_size, conv_dim=conv_dim)
    x = jax.random.normal(kx, (batch, 3, image_size, image_size), jnp.float32)

    fwd = jax.jit(discriminator_forward)
    out = jax.block_until_ready(fwd(params, x))

    assert out.shape == (batch,), out.shape
    assert bool(jnp.all((out >= 0.0) & (out <= 1.0)))        # sigmoid output range

    ref = jax.block_until_ready(jax.jit(reference_forward)(params, x))
    max_err = float(jnp.max(jnp.abs(out.astype(jnp.float32) - ref)))
    assert max_err < 5e-2, f"mismatch vs reference: {max_err}"  # bf16 tolerance

    print("KERNEL_OK")
</pallas_src>

<mosaic_0001>
module attributes {stable_mosaic.version = 11 : i64} {
  func.func @_conv_fused_kernel(%arg0: i32, %arg1: memref<8x48xbf16, #tpu.memory_space<vmem>>, %arg2: memref<48x256xbf16, #tpu.memory_space<vmem>>, %arg3: memref<8x1xf32, #tpu.memory_space<vmem>>, %arg4: memref<8x256xbf16, #tpu.memory_space<vmem>>) attributes {dimension_semantics = [#tpu.dimension_semantics<parallel>], iteration_bounds = array<i64: 2>, scalar_prefetch = 0 : i64, scratch_operands = 0 : i64, tpu.core_type = #tpu.core_type<tc>, window_params = [{pipeline_mode = #tpu.pipeline_mode<synchronous>, transform_indices = @transform_0, window_bounds = array<i64: 8, 48>}, {transform_indices = @transform_1, window_bounds = array<i64: 48, 256>}, {pipeline_mode = #tpu.pipeline_mode<synchronous>, transform_indices = @transform_2, window_bounds = array<i64: 8, 1>}, {transform_indices = @transform_3, window_bounds = array<i64: 8, 256>}]} {
    %c0 = arith.constant 0 : index
    %c0_0 = arith.constant 0 : index
    %0 = vector.load %arg1[%c0, %c0_0] : memref<8x48xbf16, #tpu.memory_space<vmem>>, vector<8x48xbf16>
    %c0_1 = arith.constant 0 : index
    %c0_2 = arith.constant 0 : index
    %1 = vector.load %arg2[%c0_1, %c0_2] : memref<48x256xbf16, #tpu.memory_space<vmem>>, vector<48x256xbf16>
    %cst = arith.constant dense<0.000000e+00> : vector<8x256xf32>
    %2 = tpu.matmul %0, %1, %cst {dimension_numbers = #tpu.dot_dimension_numbers<[1], [0], [0], [1], [0, 0, 1, 1], [], []>} : vector<8x48xbf16>, vector<48x256xbf16>, vector<8x256xf32> -> vector<8x256xf32>
    %c0_3 = arith.constant 0 : index
    %c0_4 = arith.constant 0 : index
    %3 = vector.load %arg3[%c0_3, %c0_4] : memref<8x1xf32, #tpu.memory_space<vmem>>, vector<8x1xf32>
    %4 = vector.broadcast %3 : vector<8x1xf32> to vector<8x256xf32>
    %5 = arith.addf %2, %4 : vector<8x256xf32>
    %cst_5 = arith.constant 0.000000e+00 : f32
    %6 = vector.broadcast %cst_5 : f32 to vector<8x256xf32>
    %7 = arith.cmpf oge, %5, %6 : vector<8x256xf32>
    %cst_6 = arith.constant 5.000000e-02 : f32
    %8 = vector.broadcast %cst_6 : f32 to vector<8x256xf32>
    %9 = arith.mulf %8, %5 : vector<8x256xf32>
    %10 = arith.select %7, %5, %9 : vector<8x256xi1>, vector<8x256xf32>
    %11 = arith.truncf %10 : vector<8x256xf32> to vector<8x256xbf16>
    %c0_7 = arith.constant 0 : index
    %c0_8 = arith.constant 0 : index
    %12 = vector.load %arg4[%c0_7, %c0_8] : memref<8x256xbf16, #tpu.memory_space<vmem>>, vector<8x256xbf16>
    tpu.vector_store %arg4[%c0_7, %c0_8], %11 {strides = array<i32>} : memref<8x256xbf16, #tpu.memory_space<vmem>>, vector<8x256xbf16>,
    return
  }
  func.func @transform_0(%arg0: i32) -> (i32, i32) {
    %c0_i32 = arith.constant 0 : i32
    %c0_i32_0 = arith.constant 0 : i32
    %c0_i32_1 = arith.constant 0 : i32
    return %c0_i32, %c0_i32_0 : i32, i32
  }
  func.func @transform_1(%arg0: i32) -> (i32, i32) {
    %c0_i32 = arith.constant 0 : i32
    %c0_i32_0 = arith.constant 0 : i32
    return %c0_i32, %arg0 : i32, i32
  }
  func.func @transform_2(%arg0: i32) -> (i32, i32) {
    %c0_i32 = arith.constant 0 : i32
    %c0_i32_0 = arith.constant 0 : i32
    %c0_i32_1 = arith.constant 0 : i32
    return %c0_i32, %c0_i32_0 : i32, i32
  }
  func.func @transform_3(%arg0: i32) -> (i32, i32) {
    %c0_i32 = arith.constant 0 : i32
    %c0_i32_0 = arith.constant 0 : i32
    return %c0_i32, %arg0 : i32, i32
  }
}

module attributes {stable_mosaic.version = 11 : i64} {
  func.func @_conv_fused_kernel(%arg0: i32, %arg1: memref<16x128xbf16, #tpu.memory_space<vmem>>, %arg2: memref<128x128xbf16, #tpu.memory_space<vmem>>, %arg3: memref<16x1xf32, #tpu.memory_space<vmem>>, %arg4: memref<16x1xf32, #tpu.memory_space<vmem>>, %arg5: memref<16x1xf32, #tpu.memory_space<vmem>>, %arg6: memref<16x128xbf16, #tpu.memory_space<vmem>>) attributes {dimension_semantics = [#tpu.dimension_semantics<arbitrary>], iteration_bounds = array<i64: 1>, scalar_prefetch = 0 : i64, scratch_operands = 0 : i64, tpu.core_type = #tpu.core_type<tc>, window_params = [{pipeline_mode = #tpu.pipeline_mode<synchronous>, transform_indices = @transform_0, window_bounds = array<i64: 16, 128>}, {transform_indices = @transform_1, window_bounds = array<i64: 128, 128>}, {pipeline_mode = #tpu.pipeline_mode<synchronous>, transform_indices = @transform_2, window_bounds = array<i64: 16, 1>}, {pipeline_mode = #tpu.pipeline_mode<synchronous>, transform_indices = @transform_3, window_bounds = array<i64: 16, 1>}, {pipeline_mode = #tpu.pipeline_mode<synchronous>, transform_indices = @transform_4, window_bounds = array<i64: 16, 1>}, {transform_indices = @transform_5, window_bounds = array<i64: 16, 128>}]} {
    %c0 = arith.constant 0 : index
    %c0_0 = arith.constant 0 : index
    %0 = vector.load %arg1[%c0, %c0_0] : memref<16x128xbf16, #tpu.memory_space<vmem>>, vector<16x128xbf16>
    %c0_1 = arith.constant 0 : index
    %c0_2 = arith.constant 0 : index
    %1 = vector.load %arg2[%c0_1, %c0_2] : memref<128x128xbf16, #tpu.memory_space<vmem>>, vector<128x128xbf16>
    %cst = arith.constant dense<0.000000e+00> : vector<16x128xf32>
    %2 = tpu.matmul %0, %1, %cst {dimension_numbers = #tpu.dot_dimension_numbers<[1], [0], [0], [1], [0, 0, 1, 1], [], []>} : vector<16x128xbf16>, vector<128x128xbf16>, vector<16x128xf32> -> vector<16x128xf32>
    %c0_3 = arith.constant 0 : index
    %c0_4 = arith.constant 0 : index
    %3 = vector.load %arg3[%c0_3, %c0_4] : memref<16x1xf32, #tpu.memory_space<vmem>>, vector<16x1xf32>
    %4 = vector.broadcast %3 : vector<16x1xf32> to vector<16x128xf32>
    %5 = arith.addf %2, %4 : vector<16x128xf32>
    %cst_5 = arith.constant dense<0.000000e+00> : vector<16xf32>
    %6 = vector.multi_reduction <add>, %5, %cst_5 [1] : vector<16x128xf32> to vector<16xf32>
    %7 = vector.shape_cast %6 : vector<16xf32> to vector<16x1xf32>
    %cst_6 = arith.constant 7.812500e-03 : f32
    %8 = vector.broadcast %cst_6 : f32 to vector<16x1xf32>
    %9 = arith.mulf %7, %8 : vector<16x1xf32>
    %10 = arith.mulf %5, %5 : vector<16x128xf32>
    %cst_7 = arith.constant dense<0.000000e+00> : vector<16xf32>
    %11 = vector.multi_reduction <add>, %10, %cst_7 [1] : vector<16x128xf32> to vector<16xf32>
    %12 = vector.shape_cast %11 : vector<16xf32> to vector<16x1xf32>
    %cst_8 = arith.constant 7.812500e-03 : f32
    %13 = vector.broadcast %cst_8 : f32 to vector<16x1xf32>
    %14 = arith.mulf %12, %13 : vector<16x1xf32>
    %15 = arith.mulf %9, %9 : vector<16x1xf32>
    %16 = arith.subf %14, %15 : vector<16x1xf32>
    %cst_9 = arith.constant 0.000000e+00 : f32
    %17 = vector.broadcast %cst_9 : f32 to vector<16x1xf32>
    %18 = arith.maximumf %16, %17 : vector<16x1xf32>
    %19 = vector.broadcast %9 : vector<16x1xf32> to vector<16x128xf32>
    %20 = arith.subf %5, %19 : vector<16x128xf32>
    %cst_10 = arith.constant 9.99999974E-6 : f32
    %21 = vector.broadcast %cst_10 : f32 to vector<16x1xf32>
    %22 = arith.addf %18, %21 : vector<16x1xf32>
    %23 = math.rsqrt %22 : vector<16x1xf32>
    %24 = vector.broadcast %23 : vector<16x1xf32> to vector<16x128xf32>
    %25 = arith.mulf %20, %24 : vector<16x128xf32>
    %c0_11 = arith.constant 0 : index
    %c0_12 = arith.constant 0 : index
    %26 = vector.load %arg4[%c0_11, %c0_12] : memref<16x1xf32, #tpu.memory_space<vmem>>, vector<16x1xf32>
    %27 = vector.broadcast %26 : vector<16x1xf32> to vector<16x128xf32>
    %28 = arith.mulf %25, %27 : vector<16x128xf32>
    %c0_13 = arith.constant 0 : index
    %c0_14 = arith.constant 0 : index
    %29 = vector.load %arg5[%c0_13, %c0_14] : memref<16x1xf32, #tpu.memory_space<vmem>>, vector<16x1xf32>
    %30 = vector.broadcast %29 : vector<16x1xf32> to vector<16x128xf32>
    %31 = arith.addf %28, %30 : vector<16x128xf32>
    %cst_15 = arith.constant 0.000000e+00 : f32
    %32 = vector.broadcast %cst_15 : f32 to vector<16x128xf32>
    %33 = arith.cmpf oge, %31, %32 : vector<16x128xf32>
    %cst_16 = arith.constant 5.000000e-02 : f32
    %34 = vector.broadcast %cst_16 : f32 to vector<16x128xf32>
    %35 = arith.mulf %34, %31 : vector<16x128xf32>
    %36 = arith.select %33, %31, %35 : vector<16x128xi1>, vector<16x128xf32>
    %37 = arith.truncf %36 : vector<16x128xf32> to vector<16x128xbf16>
    %c0_17 = arith.constant 0 : index
    %c0_18 = arith.constant 0 : index
    %38 = vector.load %arg6[%c0_17, %c0_18] : memref<16x128xbf16, #tpu.memory_space<vmem>>, vector<16x128xbf16>
    tpu.vector_store %arg6[%c0_17, %c0_18], %37 {strides = array<i32>} : memref<16x128xbf16, #tpu.memory_space<vmem>>, vector<16x128xbf16>,
    return
  }
  func.func @transform_0(%arg0: i32) -> (i32, i32) {
    %c0_i32 = arith.constant 0 : i32
    %c0_i32_0 = arith.constant 0 : i32
    %c0_i32_1 = arith.constant 0 : i32
    return %c0_i32, %c0_i32_0 : i32, i32
  }
  func.func @transform_1(%arg0: i32) -> (i32, i32) {
    %c0_i32 = arith.constant 0 : i32
    %c0_i32_0 = arith.constant 0 : i32
    return %c0_i32, %arg0 : i32, i32
  }
  func.func @transform_2(%arg0: i32) -> (i32, i32) {
    %c0_i32 = arith.constant 0 : i32
    %c0_i32_0 = arith.constant 0 : i32
    %c0_i32_1 = arith.constant 0 : i32
    return %c0_i32, %c0_i32_0 : i32, i32
  }
  func.func @transform_3(%arg0: i32) -> (i32, i32) {
    %c0_i32 = arith.constant 0 : i32
    %c0_i32_0 = arith.constant 0 : i32
    %c0_i32_1 = arith.constant 0 : i32
    return %c0_i32, %c0_i32_0 : i32, i32
  }
  func.func @transform_4(%arg0: i32) -> (i32, i32) {
    %c0_i32 = arith.constant 0 : i32
    %c0_i32_0 = arith.constant 0 : i32
    %c0_i32_1 = arith.constant 0 : i32
    return %c0_i32, %c0_i32_0 : i32, i32
  }
  func.func @transform_5(%arg0: i32) -> (i32, i32) {
    %c0_i32 = arith.constant 0 : i32
    %c0_i32_0 = arith.constant 0 : i32
    return %c0_i32, %arg0 : i32, i32
  }
}

module attributes {stable_mosaic.version = 11 : i64} {
  func.func @_conv_fused_kernel(%arg0: i32, %arg1: memref<32x256xbf16, #tpu.memory_space<vmem>>, %arg2: memref<256x32xbf16, #tpu.memory_space<vmem>>, %arg3: memref<32x1xf32, #tpu.memory_space<vmem>>, %arg4: memref<32x1xf32, #tpu.memory_space<vmem>>, %arg5: memref<32x1xf32, #tpu.memory_space<vmem>>, %arg6: memref<32x32xbf16, #tpu.memory_space<vmem>>) attributes {dimension_semantics = [#tpu.dimension_semantics<arbitrary>], iteration_bounds = array<i64: 1>, scalar_prefetch = 0 : i64, scratch_operands = 0 : i64, tpu.core_type = #tpu.core_type<tc>, window_params = [{pipeline_mode = #tpu.pipeline_mode<synchronous>, transform_indices = @transform_0, window_bounds = array<i64: 32, 256>}, {transform_indices = @transform_1, window_bounds = array<i64: 256, 32>}, {pipeline_mode = #tpu.pipeline_mode<synchronous>, transform_indices = @transform_2, window_bounds = array<i64: 32, 1>}, {pipeline_mode = #tpu.pipeline_mode<synchronous>, transform_indices = @transform_3, window_bounds = array<i64: 32, 1>}, {pipeline_mode = #tpu.pipeline_mode<synchronous>, transform_indices = @transform_4, window_bounds = array<i64: 32, 1>}, {transform_indices = @transform_5, window_bounds = array<i64: 32, 32>}]} {
    %c0 = arith.constant 0 : index
    %c0_0 = arith.constant 0 : index
    %0 = vector.load %arg1[%c0, %c0_0] : memref<32x256xbf16, #tpu.memory_space<vmem>>, vector<32x256xbf16>
    %c0_1 = arith.constant 0 : index
    %c0_2 = arith.constant 0 : index
    %1 = vector.load %arg2[%c0_1, %c0_2] : memref<256x32xbf16, #tpu.memory_space<vmem>>, vector<256x32xbf16>
    %cst = arith.constant dense<0.000000e+00> : vector<32x32xf32>
    %2 = tpu.matmul %0, %1, %cst {dimension_numbers = #tpu.dot_dimension_numbers<[1], [0], [0], [1], [0, 0, 1, 1], [], []>} : vector<32x256xbf16>, vector<256x32xbf16>, vector<32x32xf32> -> vector<32x32xf32>
    %c0_3 = arith.constant 0 : index
    %c0_4 = arith.constant 0 : index
    %3 = vector.load %arg3[%c0_3, %c0_4] : memref<32x1xf32, #tpu.memory_space<vmem>>, vector<32x1xf32>
    %4 = vector.broadcast %3 : vector<32x1xf32> to vector<32x32xf32>
    %5 = arith.addf %2, %4 : vector<32x32xf32>
    %cst_5 = arith.constant dense<0.000000e+00> : vector<32xf32>
    %6 = vector.multi_reduction <add>, %5, %cst_5 [1] : vector<32x32xf32> to vector<32xf32>
    %7 = vector.shape_cast %6 : vector<32xf32> to vector<32x1xf32>
    %cst_6 = arith.constant 3.125000e-02 : f32
    %8 = vector.broadcast %cst_6 : f32 to vector<32x1xf32>
    %9 = arith.mulf %7, %8 : vector<32x1xf32>
    %10 = arith.mulf %5, %5 : vector<32x32xf32>
    %cst_7 = arith.constant dense<0.000000e+00> : vector<32xf32>
    %11 = vector.multi_reduction <add>, %10, %cst_7 [1] : vector<32x32xf32> to vector<32xf32>
    %12 = vector.shape_cast %11 : vector<32xf32> to vector<32x1xf32>
    %cst_8 = arith.constant 3.125000e-02 : f32
    %13 = vector.broadcast %cst_8 : f32 to vector<32x1xf32>
    %14 = arith.mulf %12, %13 : vector<32x1xf32>
    %15 = arith.mulf %9, %9 : vector<32x1xf32>
    %16 = arith.subf %14, %15 : vector<32x1xf32>
    %cst_9 = arith.constant 0.000000e+00 : f32
    %17 = vector.broadcast %cst_9 : f32 to vector<32x1xf32>
    %18 = arith.maximumf %16, %17 : vector<32x1xf32>
    %19 = vector.broadcast %9 : vector<32x1xf32> to vector<32x32xf32>
    %20 = arith.subf %5, %19 : vector<32x32xf32>
    %cst_10 = arith.constant 9.99999974E-6 : f32
    %21 = vector.broadcast %cst_10 : f32 to vector<32x1xf32>
    %22 = arith.addf %18, %21 : vector<32x1xf32>
    %23 = math.rsqrt %22 : vector<32x1xf32>
    %24 = vector.broadcast %23 : vector<32x1xf32> to vector<32x32xf32>
    %25 = arith.mulf %20, %24 : vector<32x32xf32>
    %c0_11 = arith.constant 0 : index
    %c0_12 = arith.constant 0 : index
    %26 = vector.load %arg4[%c0_11, %c0_12] : memref<32x1xf32, #tpu.memory_space<vmem>>, vector<32x1xf32>
    %27 = vector.broadcast %26 : vector<32x1xf32> to vector<32x32xf32>
    %28 = arith.mulf %25, %27 : vector<32x32xf32>
    %c0_13 = arith.constant 0 : index
    %c0_14 = arith.constant 0 : index
    %29 = vector.load %arg5[%c0_13, %c0_14] : memref<32x1xf32, #tpu.memory_space<vmem>>, vector<32x1xf32>
    %30 = vector.broadcast %29 : vector<32x1xf32> to vector<32x32xf32>
    %31 = arith.addf %28, %30 : vector<32x32xf32>
    %cst_15 = arith.constant 0.000000e+00 : f32
    %32 = vector.broadcast %cst_15 : f32 to vector<32x32xf32>
    %33 = arith.cmpf oge, %31, %32 : vector<32x32xf32>
    %cst_16 = arith.constant 5.000000e-02 : f32
    %34 = vector.broadcast %cst_16 : f32 to vector<32x32xf32>
    %35 = arith.mulf %34, %31 : vector<32x32xf32>
    %36 = arith.select %33, %31, %35 : vector<32x32xi1>, vector<32x32xf32>
    %37 = arith.truncf %36 : vector<32x32xf32> to vector<32x32xbf16>
    %c0_17 = arith.constant 0 : index
    %c0_18 = arith.constant 0 : index
    %38 = vector.load %arg6[%c0_17, %c0_18] : memref<32x32xbf16, #tpu.memory_space<vmem>>, vector<32x32xbf16>
    tpu.vector_store %arg6[%c0_17, %c0_18], %37 {strides = array<i32>} : memref<32x32xbf16, #tpu.memory_space<vmem>>, vector<32x32xbf16>,
    return
  }
  func.func @transform_0(%arg0: i32) -> (i32, i32) {
    %c0_i32 = arith.constant 0 : i32
    %c0_i32_0 = arith.constant 0 : i32
    %c0_i32_1 = arith.constant 0 : i32
    return %c0_i32, %c0_i32_0 : i32, i32
  }
  func.func @transform_1(%arg0: i32) -> (i32, i32) {
    %c0_i32 = arith.constant 0 : i32
    %c0_i32_0 = arith.constant 0 : i32
    return %c0_i32, %arg0 : i32, i32
  }
  func.func @transform_2(%arg0: i32) -> (i32, i32) {
    %c0_i32 = arith.constant 0 : i32
    %c0_i32_0 = arith.constant 0 : i32
    %c0_i32_1 = arith.constant 0 : i32
    return %c0_i32, %c0_i32_0 : i32, i32
  }
  func.func @transform_3(%arg0: i32) -> (i32, i32) {
    %c0_i32 = arith.constant 0 : i32
    %c0_i32_0 = arith.constant 0 : i32
    %c0_i32_1 = arith.constant 0 : i32
    return %c0_i32, %c0_i32_0 : i32, i32
  }
  func.func @transform_4(%arg0: i32) -> (i32, i32) {
    %c0_i32 = arith.constant 0 : i32
    %c0_i32_0 = arith.constant 0 : i32
    %c0_i32_1 = arith.constant 0 : i32
    return %c0_i32, %c0_i32_0 : i32, i32
  }
  func.func @transform_5(%arg0: i32) -> (i32, i32) {
    %c0_i32 = arith.constant 0 : i32
    %c0_i32_0 = arith.constant 0 : i32
    return %c0_i32, %arg0 : i32, i32
  }
}

module attributes {stable_mosaic.version = 11 : i64} {
  func.func @_conv_fused_kernel(%arg0: i32, %arg1: memref<64x512xbf16, #tpu.memory_space<vmem>>, %arg2: memref<512x8xbf16, #tpu.memory_space<vmem>>, %arg3: memref<64x1xf32, #tpu.memory_space<vmem>>, %arg4: memref<64x1xf32, #tpu.memory_space<vmem>>, %arg5: memref<64x1xf32, #tpu.memory_space<vmem>>, %arg6: memref<64x8xbf16, #tpu.memory_space<vmem>>) attributes {dimension_semantics = [#tpu.dimension_semantics<arbitrary>], iteration_bounds = array<i64: 1>, scalar_prefetch = 0 : i64, scratch_operands = 0 : i64, tpu.core_type = #tpu.core_type<tc>, window_params = [{pipeline_mode = #tpu.pipeline_mode<synchronous>, transform_indices = @transform_0, window_bounds = array<i64: 64, 512>}, {transform_indices = @transform_1, window_bounds = array<i64: 512, 8>}, {pipeline_mode = #tpu.pipeline_mode<synchronous>, transform_indices = @transform_2, window_bounds = array<i64: 64, 1>}, {pipeline_mode = #tpu.pipeline_mode<synchronous>, transform_indices = @transform_3, window_bounds = array<i64: 64, 1>}, {pipeline_mode = #tpu.pipeline_mode<synchronous>, transform_indices = @transform_4, window_bounds = array<i64: 64, 1>}, {transform_indices = @transform_5, window_bounds = array<i64: 64, 8>}]} {
    %c0 = arith.constant 0 : index
    %c0_0 = arith.constant 0 : index
    %0 = vector.load %arg1[%c0, %c0_0] : memref<64x512xbf16, #tpu.memory_space<vmem>>, vector<64x512xbf16>
    %c0_1 = arith.constant 0 : index
    %c0_2 = arith.constant 0 : index
    %1 = vector.load %arg2[%c0_1, %c0_2] : memref<512x8xbf16, #tpu.memory_space<vmem>>, vector<512x8xbf16>
    %cst = arith.constant dense<0.000000e+00> : vector<64x8xf32>
    %2 = tpu.matmul %0, %1, %cst {dimension_numbers = #tpu.dot_dimension_numbers<[1], [0], [0], [1], [0, 0, 1, 1], [], []>} : vector<64x512xbf16>, vector<512x8xbf16>, vector<64x8xf32> -> vector<64x8xf32>
    %c0_3 = arith.constant 0 : index
    %c0_4 = arith.constant 0 : index
    %3 = vector.load %arg3[%c0_3, %c0_4] : memref<64x1xf32, #tpu.memory_space<vmem>>, vector<64x1xf32>
    %4 = vector.broadcast %3 : vector<64x1xf32> to vector<64x8xf32>
    %5 = arith.addf %2, %4 : vector<64x8xf32>
    %cst_5 = arith.constant dense<0.000000e+00> : vector<64xf32>
    %6 = vector.multi_reduction <add>, %5, %cst_5 [1] : vector<64x8xf32> to vector<64xf32>
    %7 = vector.shape_cast %6 : vector<64xf32> to vector<64x1xf32>
    %cst_6 = arith.constant 1.250000e-01 : f32
    %8 = vector.broadcast %cst_6 : f32 to vector<64x1xf32>
    %9 = arith.mulf %7, %8 : vector<64x1xf32>
    %10 = arith.mulf %5, %5 : vector<64x8xf32>
    %cst_7 = arith.constant dense<0.000000e+00> : vector<64xf32>
    %11 = vector.multi_reduction <add>, %10, %cst_7 [1] : vector<64x8xf32> to vector<64xf32>
    %12 = vector.shape_cast %11 : vector<64xf32> to vector<64x1xf32>
    %cst_8 = arith.constant 1.250000e-01 : f32
    %13 = vector.broadcast %cst_8 : f32 to vector<64x1xf32>
    %14 = arith.mulf %12, %13 : vector<64x1xf32>
    %15 = arith.mulf %9, %9 : vector<64x1xf32>
    %16 = arith.subf %14, %15 : vector<64x1xf32>
    %cst_9 = arith.constant 0.000000e+00 : f32
    %17 = vector.broadcast %cst_9 : f32 to vector<64x1xf32>
    %18 = arith.maximumf %16, %17 : vector<64x1xf32>
    %19 = vector.broadcast %9 : vector<64x1xf32> to vector<64x8xf32>
    %20 = arith.subf %5, %19 : vector<64x8xf32>
    %cst_10 = arith.constant 9.99999974E-6 : f32
    %21 = vector.broadcast %cst_10 : f32 to vector<64x1xf32>
    %22 = arith.addf %18, %21 : vector<64x1xf32>
    %23 = math.rsqrt %22 : vector<64x1xf32>
    %24 = vector.broadcast %23 : vector<64x1xf32> to vector<64x8xf32>
    %25 = arith.mulf %20, %24 : vector<64x8xf32>
    %c0_11 = arith.constant 0 : index
    %c0_12 = arith.constant 0 : index
    %26 = vector.load %arg4[%c0_11, %c0_12] : memref<64x1xf32, #tpu.memory_space<vmem>>, vector<64x1xf32>
    %27 = vector.broadcast %26 : vector<64x1xf32> to vector<64x8xf32>
    %28 = arith.mulf %25, %27 : vector<64x8xf32>
    %c0_13 = arith.constant 0 : index
    %c0_14 = arith.constant 0 : index
    %29 = vector.load %arg5[%c0_13, %c0_14] : memref<64x1xf32, #tpu.memory_space<vmem>>, vector<64x1xf32>
    %30 = vector.broadcast %29 : vector<64x1xf32> to vector<64x8xf32>
    %31 = arith.addf %28, %30 : vector<64x8xf32>
    %cst_15 = arith.constant 0.000000e+00 : f32
    %32 = vector.broadcast %cst_15 : f32 to vector<64x8xf32>
    %33 = arith.cmpf oge, %31, %32 : vector<64x8xf32>
    %cst_16 = arith.constant 5.000000e-02 : f32
    %34 = vector.broadcast %cst_16 : f32 to vector<64x8xf32>
    %35 = arith.mulf %34, %31 : vector<64x8xf32>
    %36 = arith.select %33, %31, %35 : vector<64x8xi1>, vector<64x8xf32>
    %37 = arith.truncf %36 : vector<64x8xf32> to vector<64x8xbf16>
    %c0_17 = arith.constant 0 : index
    %c0_18 = arith.constant 0 : index
    %38 = vector.load %arg6[%c0_17, %c0_18] : memref<64x8xbf16, #tpu.memory_space<vmem>>, vector<64x8xbf16>
    tpu.vector_store %arg6[%c0_17, %c0_18], %37 {strides = array<i32>} : memref<64x8xbf16, #tpu.memory_space<vmem>>, vector<64x8xbf16>,
    return
  }
  func.func @transform_0(%arg0: i32) -> (i32, i32) {
    %c0_i32 = arith.constant 0 : i32
    %c0_i32_0 = arith.constant 0 : i32
    %c0_i32_1 = arith.constant 0 : i32
    return %c0_i32, %c0_i32_0 : i32, i32
  }
  func.func @transform_1(%arg0: i32) -> (i32, i32) {
    %c0_i32 = arith.constant 0 : i32
    %c0_i32_0 = arith.constant 0 : i32
    return %c0_i32, %arg0 : i32, i32
  }
  func.func @transform_2(%arg0: i32) -> (i32, i32) {
    %c0_i32 = arith.constant 0 : i32
    %c0_i32_0 = arith.constant 0 : i32
    %c0_i32_1 = arith.constant 0 : i32
    return %c0_i32, %c0_i32_0 : i32, i32
  }
  func.func @transform_3(%arg0: i32) -> (i32, i32) {
    %c0_i32 = arith.constant 0 : i32
    %c0_i32_0 = arith.constant 0 : i32
    %c0_i32_1 = arith.constant 0 : i32
    return %c0_i32, %c0_i32_0 : i32, i32
  }
  func.func @transform_4(%arg0: i32) -> (i32, i32) {
    %c0_i32 = arith.constant 0 : i32
    %c0_i32_0 = arith.constant 0 : i32
    %c0_i32_1 = arith.constant 0 : i32
    return %c0_i32, %c0_i32_0 : i32, i32
  }
  func.func @transform_5(%arg0: i32) -> (i32, i32) {
    %c0_i32 = arith.constant 0 : i32
    %c0_i32_0 = arith.constant 0 : i32
    return %c0_i32, %arg0 : i32, i32
  }
}

</mosaic_0001>

<llo_original>
// kernel: discriminator_forward.4
$region0: #{discriminator_forward.4}
  #allocation0 [shape = 'u32[]', space=smem, size = 0x4, offset = 0x4, fixed_abs, tag = 'smem constant byte address 0x4 - core index']
  #allocation1 [shape = 'u32[144,128]{1,0:T(1,128)}', space=vmem, size = 0x12000, scoped, tag = 'internal scratch']
  %s0 = inlined_call_operand.vmem [shape: bf16[8,48], index: 0, kind: input, shape index: {}]
  %s1 = inlined_call_operand.vmem [shape: bf16[48,512], index: 1, kind: input, shape index: {}]
  %s2 = inlined_call_operand.vmem [shape: f32[8,1], index: 2, kind: input, shape index: {}]
  %s3 = inlined_call_operand.vmem [shape: bf16[8,512], index: 3, kind: output, shape index: {}]
  %s4 = sld [smem:[#allocation0]]
  $region83: #{discriminator_forward.4} parent=0
    _
  %s6 = ssub.s32 1, %s4
  %s7 = scalar_select 0, %s6, %s4
  $region1: #{discriminator_forward.4} parent=0
    #allocation2 [shape = 'u8[49152]{0}', space=vmem, size = 0xc000, scoped, tag = 'input window, operand 1']
    loop: start=0, step=1, limit=4
    $region2: #{discriminator_forward.4} parent=1 // loop_pre_header
      _
    $region3: #{discriminator_forward.4} parent=1 // loop_header
      %s9 = sphi 0, %s13
      %p10 = scmp.ge.s32.totalorder %s9, 4
      %s17 = sphi 0, %s17
      %s19 = sphi 0, %s17
      %s20 = sphi 0, %s19
      %s34 = sphi 0, %s20
      %s40 = sphi 0, %s42
      %s43 = sphi 0, %s40
      %s44 = sphi 0, %s43
      %s60 = sphi 0, %s44
      %s64 = sphi 0, %s64
      %s66 = sphi 0, %s64
      %s67 = sphi 0, %s66
      %s81 = sphi 0, %s67
      %s87 = sphi 0, %s89
      %s90 = sphi 0, %s87
      %s91 = sphi 0, %s90
      %s107 = sphi 0, %s91
    $region4: #{discriminator_forward.4} parent=1 // loop_header_branch
      %12 = sbr.rel (%p10) target = $region8
    $region5: #{discriminator_forward.4} parent=1 // loop_body
      %s14 = ssub.s32 %s9, 1
      %s15 = ssub.s32 %s9, 2
      %s16 = sadd.s32 %s9, 1
      %s18 = sadd.s32 %s17, 1
      %p21 = scmp.eq.s32.totalorder %s9, 1
      %p22 = scmp.ne.s32.totalorder %s17, %s19
      %p23 = scmp.eq.s32.totalorder %s9, 0
      %p24 = por %p22, %p23
      %p25 = scmp.ne.s32.totalorder %s17, %s19
      %p26 = scmp.eq.s32.totalorder %s14, 1
      %p27 = por %p25, %p26
      %p28 = scmp.ne.s32.totalorder %s19, %s20
      %p29 = scmp.eq.s32.totalorder %s14, 0
      %p30 = por %p28, %p29
      %p31 = scmp.ne.s32.totalorder %s19, %s20
      %p32 = scmp.eq.s32.totalorder %s15, 1
      %p33 = por %p31, %p32
      %p35 = scmp.ne.s32.totalorder %s20, %s34
      %p36 = scmp.eq.s32.totalorder %s15, 0
      %p37 = por %p35, %p36
      %s38 = ssub.s32 %s9, %s16
      %p39 = scmp.eq.s32.totalorder %s38, 0
      %s41 = sadd.s32 %s40, 1
      %s42 = scalar_select %p39, %s40, %s41
      %p45 = pneg %p39
      %p46 = scmp.eq.s32.totalorder %s9, 1
      %p47 = por %p45, %p46
      %p48 = scmp.ne.s32.totalorder %s40, %s43
      %p49 = scmp.eq.s32.totalorder %s9, 0
      %p50 = por %p48, %p49
      %p51 = scmp.ne.s32.totalorder %s40, %s43
      %p52 = scmp.eq.s32.totalorder %s14, 1
      %p53 = por %p51, %p52
      %p54 = scmp.ne.s32.totalorder %s43, %s44
      %p55 = scmp.eq.s32.totalorder %s14, 0
      %p56 = por %p54, %p55
      %p57 = scmp.ne.s32.totalorder %s43, %s44
      %p58 = scmp.eq.s32.totalorder %s15, 1
      %p59 = por %p57, %p58
      %p61 = scmp.ne.s32.totalorder %s44, %s60
      %p62 = scmp.eq.s32.totalorder %s15, 0
      %p63 = por %p61, %p62
      %s65 = sadd.s32 %s64, 1
      %p68 = scmp.eq.s32.totalorder %s9, 1
      %p69 = scmp.ne.s32.totalorder %s64, %s66
      %p70 = scmp.eq.s32.totalorder %s9, 0
      %p71 = por %p69, %p70
      %p72 = scmp.ne.s32.totalorder %s64, %s66
      %p73 = scmp.eq.s32.totalorder %s14, 1
      %p74 = por %p72, %p73
      %p75 = scmp.ne.s32.totalorder %s66, %s67
      %p76 = scmp.eq.s32.totalorder %s14, 0
      %p77 = por %p75, %p76
      %p78 = scmp.ne.s32.totalorder %s66, %s67
      %p79 = scmp.eq.s32.totalorder %s15, 1
      %p80 = por %p78, %p79
      %p82 = scmp.ne.s32.totalorder %s67, %s81
      %p83 = scmp.eq.s32.totalorder %s15, 0
      %p84 = por %p82, %p83
      %s85 = ssub.s32 %s9, %s16
      %p86 = scmp.eq.s32.totalorder %s85, 0
      %s88 = sadd.s32 %s87, 1
      %s89 = scalar_select %p86, %s87, %s88
      %p92 = pneg %p86
      %p93 = scmp.eq.s32.totalorder %s9, 1
      %p94 = por %p92, %p93
      %p95 = scmp.ne.s32.totalorder %s87, %s90
      %p96 = scmp.eq.s32.totalorder %s9, 0
      %p97 = por %p95, %p96
      %p98 = scmp.ne.s32.totalorder %s87, %s90
      %p99 = scmp.eq.s32.totalorder %s14, 1
      %p100 = por %p98, %p99
      %p101 = scmp.ne.s32.totalorder %s90, %s91
      %p102 = scmp.eq.s32.totalorder %s14, 0
      %p103 = por %p101, %p102
      %p104 = scmp.ne.s32.totalorder %s90, %s91
      %p105 = scmp.eq.s32.totalorder %s15, 1
      %p106 = por %p104, %p105
      %p108 = scmp.ne.s32.totalorder %s91, %s107
      %p109 = scmp.eq.s32.totalorder %s15, 0
      %p110 = por %p108, %p109
      %p111 = scmp.le.s32.totalorder 1, %s9
      %p112 = scmp.lt.s32.totalorder %s9, 3
      %p113 = pnand %p111, %p112
      %p114 = pneg %p113
      // Predicated region
      $region9: #{discriminator_forward.4} parent=5 // pred_check
        _
      $region10: #{discriminator_forward.4} parent=5 // pred_check_branch
        %116 = sbr.rel (%p113) target = $region12
      $region11: #{discriminator_forward.4} parent=5 // pred_region
        %s117 = ssub.s32 %s9, 1
        // Predicated region
        $region13: #{discriminator_forward.4} parent=11 // pred_check
          %p118 = pneg %p30
        $region14: #{discriminator_forward.4} parent=11 // pred_check_branch
          %120 = sbr.rel (%p118) target = $region16
        $region15: #{discriminator_forward.4} parent=11 // pred_region
          _
        $region16: #{discriminator_forward.4} parent=11 // pred_fallthru
          _
        // Predicated region
        $region17: #{discriminator_forward.4} parent=11 // pred_check
          %p121 = pneg %p77
        $region18: #{discriminator_forward.4} parent=11 // pred_check_branch
          %123 = sbr.rel (%p121) target = $region20
        $region19: #{discriminator_forward.4} parent=11 // pred_region
          _
        $region20: #{discriminator_forward.4} parent=11 // pred_fallthru
          _
      $region12: #{discriminator_forward.4} parent=5 // pred_fallthru
        _
      %p124 = scmp.lt.s32.totalorder %s9, 2
      // Predicated region
      $region21: #{discriminator_forward.4} parent=5 // pred_check
        %p125 = pneg %p124
      $region22: #{discriminator_forward.4} parent=5 // pred_check_branch
        %127 = sbr.rel (%p125) target = $region24
      $region23: #{discriminator_forward.4} parent=5 // pred_region
        // Predicated region
        $region25: #{discriminator_forward.4} parent=23 // pred_check
          %p128 = pneg %p50
        $region26: #{discriminator_forward.4} parent=23 // pred_check_branch
          %130 = sbr.rel (%p128) target = $region28
        $region27: #{discriminator_forward.4} parent=23 // pred_region
          %s131 = sand.u32 %s40, 1
          %s132 = sand.u32 %s40, 1
          %s133 = smul.addr %s132, 48
          %s134 = scalar_lea.vmem [#allocation2], %s133
          %s135 = smul.u32 2, %s9
          %s136 = smul.addr %s135, 4
          %s137 = scalar_lea.vmem %s1, %s136
          // Predicated region
          $region29: #{discriminator_forward.4} parent=27 // pred_check
            _
          $region30: #{discriminator_forward.4} parent=27 // pred_check_branch
            %139 = sbr.rel (0) target = $region32
          $region31: #{discriminator_forward.4} parent=27 // pred_region
            // Predicated region
            $region33: #{discriminator_forward.4} parent=31 // pred_check
              _
            $region34: #{discriminator_forward.4} parent=31 // pred_check_branch
              %141 = sbr.rel (0) target = $region36
            $region35: #{discriminator_forward.4} parent=31 // pred_region
              // Predicated region
              $region48: #{discriminator_forward.4} parent=35 // pred_check
                _
              $region49: #{discriminator_forward.4} parent=35 // pred_check_branch
                %166 = sbr.rel (0) target = $region51
              $region50: #{discriminator_forward.4} parent=35 // pred_region
                loop: start=0, step=1, limit=1
                $region52: #{discriminator_forward.4} parent=50 // loop_pre_header
                  _
                $region53: #{discriminator_forward.4} parent=50 // loop_header
                  %s168 = sphi 0, %s172
                  %p169 = scmp.ge.s32.totalorder %s168, 1
                  %s173 = sphi %s137, %s137
                  %s174 = sphi %s134, %s134
                $region54: #{discriminator_forward.4} parent=50 // loop_header_branch
                  %171 = sbr.rel (%p169) target = $region58
                $region55: #{discriminator_forward.4} parent=50 // loop_body
                  %v175 = vld [vmem:[%s173] sm:$0xff]
                  %176 = vst [vmem:[%s174] sm:$0xff] %v175
                  %v177 = vld [vmem:[%s173 + $0x10] sm:$0xff]
                  %178 = vst [vmem:[%s174 + $0x8] sm:$0xff] %v177
                  %v179 = vld [vmem:[%s173 + $0x20] sm:$0xff]
                  %180 = vst [vmem:[%s174 + $0x10] sm:$0xff] %v179
                  %v181 = vld [vmem:[%s173 + $0x30] sm:$0xff]
                  %182 = vst [vmem:[%s174 + $0x18] sm:$0xff] %v181
                  %v183 = vld [vmem:[%s173 + $0x40] sm:$0xff]
                  %184 = vst [vmem:[%s174 + $0x20] sm:$0xff] %v183
                  %v185 = vld [vmem:[%s173 + $0x50] sm:$0xff]
                  %186 = vst [vmem:[%s174 + $0x28] sm:$0xff] %v185
                $region56: #{discriminator_forward.4} parent=50 // loop_footer
                  %s172 = sadd.s32 1, %s168
                $region57: #{discriminator_forward.4} parent=50 // loop_footer_branch
                  %167 = sbr.rel target = $region53
                $region58: #{discriminator_forward.4} parent=50 // loop_exit
                  _
              $region51: #{discriminator_forward.4} parent=35 // pred_fallthru
                _
              // Predicated region
              $region59: #{discriminator_forward.4} parent=35 // pred_check
                _
              $region60: #{discriminator_forward.4} parent=35 // pred_check_branch
                %188 = sbr.rel target = $region62
              $region61: #{discriminator_forward.4} parent=35 // pred_region
                _
              $region62: #{discriminator_forward.4} parent=35 // pred_fallthru
                _
            $region36: #{discriminator_forward.4} parent=31 // pred_fallthru
              _
            // Predicated region
            $region37: #{discriminator_forward.4} parent=31 // pred_check
              _
            $region38: #{discriminator_forward.4} parent=31 // pred_check_branch
              %143 = sbr.rel target = $region40
            $region39: #{discriminator_forward.4} parent=31 // pred_region
              loop: start=0, step=1, limit=1
              $region41: #{discriminator_forward.4} parent=39 // loop_pre_header
                _
              $region42: #{discriminator_forward.4} parent=39 // loop_header
                %s146 = sphi 0, %s150
                %p147 = scmp.ge.s32.totalorder %s146, 1
                %s151 = sphi %s137, %s137
                %s152 = sphi %s134, %s134
              $region43: #{discriminator_forward.4} parent=39 // loop_header_branch
                %149 = sbr.rel (%p147) target = $region47
              $region44: #{discriminator_forward.4} parent=39 // loop_body
                %v153 = vld [vmem:[%s151] sm:$0xff]
                %154 = vst [vmem:[%s152] sm:$0xff] %v153
                %v155 = vld [vmem:[%s151 + $0x10] sm:$0xff]
                %156 = vst [vmem:[%s152 + $0x8] sm:$0xff] %v155
                %v157 = vld [vmem:[%s151 + $0x20] sm:$0xff]
                %158 = vst [vmem:[%s152 + $0x10] sm:$0xff] %v157
                %v159 = vld [vmem:[%s151 + $0x30] sm:$0xff]
                %160 = vst [vmem:[%s152 + $0x18] sm:$0xff] %v159
                %v161 = vld [vmem:[%s151 + $0x40] sm:$0xff]
                %162 = vst [vmem:[%s152 + $0x20] sm:$0xff] %v161
                %v163 = vld [vmem:[%s151 + $0x50] sm:$0xff]
                %164 = vst [vmem:[%s152 + $0x28] sm:$0xff] %v163
              $region45: #{discriminator_forward.4} parent=39 // loop_footer
                %s150 = sadd.s32 1, %s146
              $region46: #{discriminator_forward.4} parent=39 // loop_footer_branch
                %145 = sbr.rel target = $region42
              $region47: #{discriminator_forward.4} parent=39 // loop_exit
                _
            $region40: #{discriminator_forward.4} parent=31 // pred_fallthru
              _
          $region32: #{discriminator_forward.4} parent=27 // pred_fallthru
            _
          %189 = vnop
        $region28: #{discriminator_forward.4} parent=23 // pred_fallthru
          _
      $region24: #{discriminator_forward.4} parent=5 // pred_fallthru
        _
      %p190 = scmp.le.s32.totalorder 1, %s9
      %p191 = scmp.lt.s32.totalorder %s9, 3
      %p192 = pnand %p190, %p191
      %p193 = pneg %p192
      // Predicated region
      $region63: #{discriminator_forward.4} parent=5 // pred_check
        _
      $region64: #{discriminator_forward.4} parent=5 // pred_check_branch
        %195 = sbr.rel (%p192) target = $region66
      $region65: #{discriminator_forward.4} parent=5 // pred_region
        %s196 = ssub.s32 %s9, 1
        %s197 = sand.u32 %s43, 1
        %s198 = sand.u32 %s43, 1
        %s199 = smul.addr %s198, 48
        %s200 = scalar_lea.vmem [#allocation2], %s199
        // Predicated region
        $region67: #{discriminator_forward.4} parent=65 // pred_check
          %p201 = pneg %p56
        $region68: #{discriminator_forward.4} parent=65 // pred_check_branch
          %203 = sbr.rel (%p201) target = $region70
        $region69: #{discriminator_forward.4} parent=65 // pred_region
          _
        $region70: #{discriminator_forward.4} parent=65 // pred_fallthru
          _
        %p204 = pneg %p30
        %p205 = pneg %p27
        %s206 = sand.u32 %s43, 1
        %s207 = sand.u32 %s43, 1
        %s208 = smul.addr %s207, 48
        %s209 = scalar_lea.vmem [#allocation2], %s208
        %p210 = pneg %p56
        %p211 = pneg %p53
        %p212 = pneg %p77
        %p213 = pneg %p74
        %p214 = pneg %p103
        %p215 = pneg %p100
        %s216 = smul.u32 2, %s14
        %p217 = scmp.lt.s32.totalorder %s216, 3
        %s218 = scalar_select %p217, %s216, 3
        %s219 = smul.addr %s218, 4
        %s220 = scalar_lea.vmem %s3, %s219
        %s221 = smul.u32 2, %s14
        %s222 = smul.u32 2, %s14
        %p223 = scmp.lt.s32.totalorder %s222, 3
        %s224 = scalar_select %p223, %s222, 3
        %s225 = smul.addr %s224, 4
        %s226 = scalar_lea.vmem %s3, %s225
        %s227 = smul.u32 2, %s14
        %v229 = vld [vmem:[%s0] sm:$0xf]
        %v230 = vld [vmem:[%s200] sm:$0xff]
        %v231 = vld [vmem:[%s200 + $0x8] sm:$0xff]
        %v232 = vld [vmem:[%s200 + $0x10] sm:$0xff]
        %v233 = vld [vmem:[%s200 + $0x18] sm:$0xff]
        %v234 = vld [vmem:[%s200 + $0x20] sm:$0xff]
        %v235 = vld [vmem:[%s200 + $0x28] sm:$0xff]
        %v236 = vld [vmem:[%s2] sm:$0xff]
        %238 = vset.pattern.permute.xlu0 0
        %239 = vperm.xlu0 %238, %v236
        %v240 = vpop.permute.xlu0 %239
        %v248 = vunpack.c.l.b16 %v230
        %v249 = vunpack.c.h.b16 %v230
        %v250 = vunpack.c.l.b16 %v231
        %v251 = vunpack.c.h.b16 %v231
        %v252 = vunpack.c.l.b16 %v232
        %v253 = vunpack.c.h.b16 %v232
        %v254 = vunpack.c.l.b16 %v233
        %v255 = vunpack.c.h.b16 %v233
        %v256 = vunpack.c.l.b16 %v234
        %v257 = vunpack.c.h.b16 %v234
        %v258 = vunpack.c.l.b16 %v235
        %v259 = vunpack.c.h.b16 %v235
        %v260 = vpack.c.b16 %v250, %v248
        %v261 = vpack.c.b16 %v251, %v249
        %v262 = vpack.c.b16 %v254, %v252
        %v263 = vpack.c.b16 %v255, %v253
        %v264 = vpack.c.b16 %v258, %v256
        %v265 = vpack.c.b16 %v259, %v257
        %vm272 = vcmask 392192
        %v274 = vsel %vm272, %v229, 0
        %276 = vmatprep.subr.bf16.mxu0 %v261
        %277 = vmatpush1.bf16.msra.mxu0 %v260
        %278 = vmatprep.subr.bf16.mxu0 %v263
        %279 = vmatpush1.bf16.msra.mxu0 %v262
        %280 = vmatprep.subr.bf16.mxu0 %v265
        %281 = vmatpush1.bf16.msra.mxu0 %v264
        %282 = vmatprep.subr.bf16.mxu0 0
        %283 = vmatpush1.bf16.msra.mxu0 0
        %284 = vmatprep.subr.bf16.mxu0 0
        %285 = vmatpush1.bf16.msra.mxu0 0
        %286 = vmatprep.subr.bf16.mxu0 0
        %287 = vmatpush1.bf16.msra.mxu0 0
        %288 = vmatprep.subr.bf16.mxu0 0
        %289 = vmatpush1.bf16.msra.mxu0 0
        %290 = vmatprep.subr.bf16.mxu0 0
        %291 = vmatpush1.bf16.msra.mxu0 0
        %292 = vmatprep.subr.bf16.mxu0 0
        %293 = vmatpush1.bf16.msra.mxu0 0
        %294 = vmatprep.subr.bf16.mxu0 0
        %295 = vmatpush1.bf16.msra.mxu0 0
        %296 = vmatprep.subr.bf16.mxu0 0
        %297 = vmatpush1.bf16.msra.mxu0 0
        %298 = vmatprep.subr.bf16.mxu0 0
        %299 = vmatpush1.bf16.msra.mxu0 0
        %300 = vmatprep.subr.bf16.mxu0 0
        %301 = vmatpush1.bf16.msra.mxu0 0
        %302 = vmatprep.subr.bf16.mxu0 0
        %303 = vmatpush1.bf16.msra.mxu0 0
        %304 = vmatprep.subr.bf16.mxu0 0
        %305 = vmatpush1.bf16.msra.mxu0 0
        %306 = vmatprep.subr.bf16.mxu0 0
        %307 = vmatpush1.bf16.msra.mxu0 0
        %308 = vmatprep.mubr.bf16.mxu0 0
        %309 = vmatmul.mubr.bf16.gmra.mrb[0].mxu0 %v274
        %v310 = vpop.f32.mrb[0].mxu0
        %v311 = vadd.f32 %v240, %v310
        %v312 = vpop.f32.mrb[0].mxu0
        %v313 = vadd.f32 %v240, %v312
        %v314 = vpop.f32.mrb[0].mxu0
        %v315 = vpop.f32.mrb[0].mxu0
        %316 = vdwg.mxu0
        %vm317 = vcmp.ge.f32.partialorder %v311, 0.0
        %vm318 = vcmp.ge.f32.partialorder %v313, 0.0
        %v319 = vmul.f32 %v311, 0.05
        %v320 = vmul.f32 %v313, 0.05
        %v321 = vsel %vm317, %v311, %v319
        %v322 = vsel %vm318, %v313, %v320
        %v323 = vpack.c.bf16 %v321, %v321
        %v324 = vpack.c.bf16 %v322, %v322
        %v327 = vunpack.c.l.b16 %v323
        %v328 = vunpack.c.l.b16 %v324
        %v329 = vpack.c.b16 %v328, %v327
        %331 = vst [vmem:[%s226] sm:$0xff] %v329
        %s332 = smul.u32 2, %s14
        %p333 = scmp.lt.s32.totalorder %s332, 3
        %s334 = scalar_select %p333, %s332, 3
        %s335 = smul.addr %s334, 4
        %s336 = scalar_lea.vmem %s3, %s335
        // Predicated region
        $region71: #{discriminator_forward.4} parent=65 // pred_check
          %p337 = pneg %p100
        $region72: #{discriminator_forward.4} parent=65 // pred_check_branch
          %339 = sbr.rel (%p337) target = $region74
        $region73: #{discriminator_forward.4} parent=65 // pred_region
          %s340 = smul.u32 2, %s14
        $region74: #{discriminator_forward.4} parent=65 // pred_fallthru
          _
      $region66: #{discriminator_forward.4} parent=5 // pred_fallthru
        _
      %p341 = scmp.le.s32.totalorder 2, %s9
      // Predicated region
      $region75: #{discriminator_forward.4} parent=5 // pred_check
        %p342 = pneg %p341
      $region76: #{discriminator_forward.4} parent=5 // pred_check_branch
        %344 = sbr.rel (%p342) target = $region78
      $region77: #{discriminator_forward.4} parent=5 // pred_region
        %s345 = ssub.s32 %s9, 2
        // Predicated region
        $region79: #{discriminator_forward.4} parent=77 // pred_check
          %p346 = pneg %p106
        $region80: #{discriminator_forward.4} parent=77 // pred_check_branch
          %348 = sbr.rel (%p346) target = $region82
        $region81: #{discriminator_forward.4} parent=77 // pred_region
          %s349 = smul.u32 2, %s15
          %p350 = scmp.lt.s32.totalorder %s349, 3
          %s351 = scalar_select %p350, %s349, 3
          %s352 = smul.addr %s351, 4
          %s353 = scalar_lea.vmem %s3, %s352
        $region82: #{discriminator_forward.4} parent=77 // pred_fallthru
          _
      $region78: #{discriminator_forward.4} parent=5 // pred_fallthru
        _
    $region6: #{discriminator_forward.4} parent=1 // loop_footer
      %s13 = sadd.s32 1, %s9
    $region7: #{discriminator_forward.4} parent=1 // loop_footer_branch
      %8 = sbr.rel target = $region3
    $region8: #{discriminator_forward.4} parent=1 // loop_exit
      _

// kernel: discriminator_forward.5
$region0: #{discriminator_forward.5}
  #allocation0 [shape = 'u32[]', space=smem, size = 0x4, offset = 0x4, fixed_abs, tag = 'smem constant byte address 0x4 - core index']
  #allocation1 [shape = 'u32[144,128]{1,0:T(1,128)}', space=vmem, size = 0x12000, scoped, tag = 'internal scratch']
  %s0 = inlined_call_operand.vmem [shape: bf16[16,128], index: 0, kind: input, shape index: {}]
  %s1 = inlined_call_operand.vmem [shape: bf16[128,128], index: 1, kind: input, shape index: {}]
  %s2 = inlined_call_operand.vmem [shape: f32[16,1], index: 2, kind: input, shape index: {}]
  %s3 = inlined_call_operand.vmem [shape: f32[16,1], index: 3, kind: input, shape index: {}]
  %s4 = inlined_call_operand.vmem [shape: f32[16,1], index: 4, kind: input, shape index: {}]
  %s5 = inlined_call_operand.vmem [shape: bf16[16,128], index: 5, kind: output, shape index: {}]
  %s6 = sld [smem:[#allocation0]]
  $region30: #{discriminator_forward.5} parent=0
    _
  %s8 = ssub.s32 1, %s6
  %s9 = scalar_select 0, %s8, %s6
  // Predicated region
  $region2: #{discriminator_forward.5} parent=0 // pred_check
    _
  $region3: #{discriminator_forward.5} parent=0 // pred_check_branch
    %11 = sbr.rel (0) target = $region5
  $region4: #{discriminator_forward.5} parent=0 // pred_region
    _
  $region5: #{discriminator_forward.5} parent=0 // pred_fallthru
    _
  // Predicated region
  $region6: #{discriminator_forward.5} parent=0 // pred_check
    _
  $region7: #{discriminator_forward.5} parent=0 // pred_check_branch
    %13 = sbr.rel (0) target = $region9
  $region8: #{discriminator_forward.5} parent=0 // pred_region
    _
  $region9: #{discriminator_forward.5} parent=0 // pred_fallthru
    _
  // Predicated region
  $region10: #{discriminator_forward.5} parent=0 // pred_check
    _
  $region11: #{discriminator_forward.5} parent=0 // pred_check_branch
    %15 = sbr.rel (0) target = $region13
  $region12: #{discriminator_forward.5} parent=0 // pred_region
    _
  $region13: #{discriminator_forward.5} parent=0 // pred_fallthru
    _
  // Predicated region
  $region14: #{discriminator_forward.5} parent=0 // pred_check
    _
  $region15: #{discriminator_forward.5} parent=0 // pred_check_branch
    %17 = sbr.rel (0) target = $region17
  $region16: #{discriminator_forward.5} parent=0 // pred_region
    _
  $region17: #{discriminator_forward.5} parent=0 // pred_fallthru
    _
  // Predicated region
  $region18: #{discriminator_forward.5} parent=0 // pred_check
    _
  $region19: #{discriminator_forward.5} parent=0 // pred_check_branch
    %19 = sbr.rel (0) target = $region21
  $region20: #{discriminator_forward.5} parent=0 // pred_region
    _
  $region21: #{discriminator_forward.5} parent=0 // pred_fallthru
    _
  %v21 = vld [vmem:[%s0] sm:$0xf]
  %v22 = vld [vmem:[%s0 + $0x4] sm:$0xf]
  %v23 = vld [vmem:[%s1] sm:$0xf]
  %v24 = vld [vmem:[%s1 + $0x4] sm:$0xf]
  %v25 = vld [vmem:[%s1 + $0x8] sm:$0xf]
  %v26 = vld [vmem:[%s1 + $0xc] sm:$0xf]
  %v27 = vld [vmem:[%s1 + $0x10] sm:$0xf]
  %v28 = vld [vmem:[%s1 + $0x14] sm:$0xf]
  %v29 = vld [vmem:[%s1 + $0x18] sm:$0xf]
  %v30 = vld [vmem:[%s1 + $0x1c] sm:$0xf]
  %v31 = vld [vmem:[%s1 + $0x20] sm:$0xf]
  %v32 = vld [vmem:[%s1 + $0x24] sm:$0xf]
  %v33 = vld [vmem:[%s1 + $0x28] sm:$0xf]
  %v34 = vld [vmem:[%s1 + $0x2c] sm:$0xf]
  %v35 = vld [vmem:[%s1 + $0x30] sm:$0xf]
  %v36 = vld [vmem:[%s1 + $0x34] sm:$0xf]
  %v37 = vld [vmem:[%s1 + $0x38] sm:$0xf]
  %v38 = vld [vmem:[%s1 + $0x3c] sm:$0xf]
  %v39 = vld [vmem:[%s2] sm:$0xff]
  %v40 = vld [vmem:[%s2 + $0x8] sm:$0xff]
  %42 = vset.pattern.permute.xlu0 0
  %43 = vperm.xlu0 %42, %v39
  %v44 = vpop.permute.xlu0 %43
  %47 = vset.pattern.permute.xlu0 0
  %48 = vperm.xlu0 %47, %v40
  %v49 = vpop.permute.xlu0 %48
  %v53 = vunpack.c.l.b16 %v21
  %v54 = vunpack.c.l.b16 %v22
  %v55 = vpack.c.b16 %v54, %v53
  %v73 = vunpack.c.l.b16 %v23
  %v74 = vunpack.c.l.b16 %v24
  %v75 = vunpack.c.l.b16 %v25
  %v76 = vunpack.c.l.b16 %v26
  %v77 = vunpack.c.l.b16 %v27
  %v78 = vunpack.c.l.b16 %v28
  %v79 = vunpack.c.l.b16 %v29
  %v80 = vunpack.c.l.b16 %v30
  %v81 = vunpack.c.l.b16 %v31
  %v82 = vunpack.c.l.b16 %v32
  %v83 = vunpack.c.l.b16 %v33
  %v84 = vunpack.c.l.b16 %v34
  %v85 = vunpack.c.l.b16 %v35
  %v86 = vunpack.c.l.b16 %v36
  %v87 = vunpack.c.l.b16 %v37
  %v88 = vunpack.c.l.b16 %v38
  %v89 = vpack.c.b16 %v74, %v73
  %v90 = vpack.c.b16 %v76, %v75
  %v91 = vpack.c.b16 %v78, %v77
  %v92 = vpack.c.b16 %v80, %v79
  %v93 = vpack.c.b16 %v82, %v81
  %v94 = vpack.c.b16 %v84, %v83
  %v95 = vpack.c.b16 %v86, %v85
  %v96 = vpack.c.b16 %v88, %v87
  %105 = vmatprep.subr.bf16.mxu0 0
  %106 = vmatpush1.bf16.msra.mxu0 %v89
  %107 = vmatprep.subr.bf16.mxu0 0
  %108 = vmatpush1.bf16.msra.mxu0 %v90
  %109 = vmatprep.subr.bf16.mxu0 0
  %110 = vmatpush1.bf16.msra.mxu0 %v91
  %111 = vmatprep.subr.bf16.mxu0 0
  %112 = vmatpush1.bf16.msra.mxu0 %v92
  %113 = vmatprep.subr.bf16.mxu0 0
  %114 = vmatpush1.bf16.msra.mxu0 %v93
  %115 = vmatprep.subr.bf16.mxu0 0
  %116 = vmatpush1.bf16.msra.mxu0 %v94
  %117 = vmatprep.subr.bf16.mxu0 0
  %118 = vmatpush1.bf16.msra.mxu0 %v95
  %119 = vmatprep.subr.bf16.mxu0 0
  %120 = vmatpush1.bf16.msra.mxu0 %v96
  %121 = vmatprep.subr.bf16.mxu0 0
  %122 = vmatpush1.bf16.msra.mxu0 0
  %123 = vmatprep.subr.bf16.mxu0 0
  %124 = vmatpush1.bf16.msra.mxu0 0
  %125 = vmatprep.subr.bf16.mxu0 0
  %126 = vmatpush1.bf16.msra.mxu0 0
  %127 = vmatprep.subr.bf16.mxu0 0
  %128 = vmatpush1.bf16.msra.mxu0 0
  %129 = vmatprep.subr.bf16.mxu0 0
  %130 = vmatpush1.bf16.msra.mxu0 0
  %131 = vmatprep.subr.bf16.mxu0 0
  %132 = vmatpush1.bf16.msra.mxu0 0
  %133 = vmatprep.subr.bf16.mxu0 0
  %134 = vmatpush1.bf16.msra.mxu0 0
  %135 = vmatprep.subr.bf16.mxu0 0
  %136 = vmatpush1.bf16.msra.mxu0 0
  %137 = vmatprep.mubr.bf16.mxu0 0
  %138 = vmatmul.mubr.bf16.gmra.mrb[0].mxu0 %v55
  %v139 = vpop.f32.mrb[0].mxu0
  %v140 = vadd.f32 %v44, %v139
  %v141 = vpop.f32.mrb[0].mxu0
  %v142 = vpop.f32.mrb[0].mxu0
  %v143 = vadd.f32 %v49, %v142
  %v144 = vpop.f32.mrb[0].mxu0
  %145 = vdwg.mxu0
  %146 = vadd.xlane.f32.xlu0 %v140
  %v147 = vpop.xlane.xlu0 %146
  %148 = vadd.xlane.f32.xlu0 %v143
  %v149 = vpop.xlane.xlu0 %148
  %v150 = vmul.f32 %v147, 0.0078125
  %v151 = vmul.f32 %v149, 0.0078125
  %v152 = vmul.f32 %v140, %v140
  %v153 = vmul.f32 %v143, %v143
  %154 = vadd.xlane.f32.xlu0 %v152
  %v155 = vpop.xlane.xlu0 %154
  %156 = vadd.xlane.f32.xlu0 %v153
  %v157 = vpop.xlane.xlu0 %156
  %v158 = vmul.f32 %v155, 0.0078125
  %v159 = vmul.f32 %v157, 0.0078125
  %v160 = vmul.f32 %v150, %v150
  %v161 = vmul.f32 %v151, %v151
  %v162 = vsub.f32 %v158, %v160
  %v163 = vsub.f32 %v159, %v161
  %v164 = vmax.f32 %v162, 0.0
  %v165 = vmax.f32 %v163, 0.0
  %v166 = vsub.f32 %v140, %v150
  %v167 = vsub.f32 %v143, %v151
  %v168 = vadd.f32 %v164, 1e-05
  %v169 = vadd.f32 %v165, 1e-05
  %v170 = vrsqrt.pop %v168
  %v171 = vrsqrt.pop %v169
  %v172 = vmul.f32 %v166, %v170
  %v173 = vmul.f32 %v167, %v171
  %v174 = vld [vmem:[%s3] sm:$0xff]
  %v175 = vld [vmem:[%s3 + $0x8] sm:$0xff]
  %177 = vset.pattern.permute.xlu0 0
  %178 = vperm.xlu0 %177, %v174
  %v179 = vpop.permute.xlu0 %178
  %182 = vset.pattern.permute.xlu0 0
  %183 = vperm.xlu0 %182, %v175
  %v184 = vpop.permute.xlu0 %183
  %v186 = vmul.f32 %v172, %v179
  %v187 = vmul.f32 %v173, %v184
  %v188 = vld [vmem:[%s4] sm:$0xff]
  %v189 = vld [vmem:[%s4 + $0x8] sm:$0xff]
  %191 = vset.pattern.permute.xlu0 0
  %192 = vperm.xlu0 %191, %v188
  %v193 = vpop.permute.xlu0 %192
  %196 = vset.pattern.permute.xlu0 0
  %197 = vperm.xlu0 %196, %v189
  %v198 = vpop.permute.xlu0 %197
  %v200 = vadd.f32 %v186, %v193
  %v201 = vadd.f32 %v187, %v198
  %vm202 = vcmp.ge.f32.partialorder %v200, 0.0
  %vm203 = vcmp.ge.f32.partialorder %v201, 0.0
  %v204 = vmul.f32 %v200, 0.05
  %v205 = vmul.f32 %v201, 0.05
  %v206 = vsel %vm202, %v200, %v204
  %v207 = vsel %vm203, %v201, %v205
  %v208 = vpack.c.bf16 %v207, %v206
  %v210 = vunpack.c.l.b16 %v208
  %v211 = vunpack.c.h.b16 %v208
  %v212 = vpack.c.b16 %v210, %v210
  %v213 = vpack.c.b16 %v211, %v211
  %216 = vst [vmem:[%s5] sm:$0xf] %v212
  %217 = vst [vmem:[%s5 + $0x4] sm:$0xf] %v213
  // Predicated region
  $region22: #{discriminator_forward.5} parent=0 // pred_check
    _
  $region23: #{discriminator_forward.5} parent=0 // pred_check_branch
    %219 = sbr.rel (0) target = $region25
  $region24: #{discriminator_forward.5} parent=0 // pred_region
    _
  $region25: #{discriminator_forward.5} parent=0 // pred_fallthru
    _
  // Predicated region
  $region26: #{discriminator_forward.5} parent=0 // pred_check
    _
  $region27: #{discriminator_forward.5} parent=0 // pred_check_branch
    %221 = sbr.rel (0) target = $region29
  $region28: #{discriminator_forward.5} parent=0 // pred_region
    _
  $region29: #{discriminator_forward.5} parent=0 // pred_fallthru
    _

// kernel: discriminator_forward.6
$region0: #{discriminator_forward.6}
  #allocation0 [shape = 'u32[]', space=smem, size = 0x4, offset = 0x4, fixed_abs, tag = 'smem constant byte address 0x4 - core index']
  #allocation1 [shape = 'u32[144,128]{1,0:T(1,128)}', space=vmem, size = 0x12000, scoped, tag = 'internal scratch']
  %s0 = inlined_call_operand.vmem [shape: bf16[32,256], index: 0, kind: input, shape index: {}]
  %s1 = inlined_call_operand.vmem [shape: bf16[256,32], index: 1, kind: input, shape index: {}]
  %s2 = inlined_call_operand.vmem [shape: f32[32,1], index: 2, kind: input, shape index: {}]
  %s3 = inlined_call_operand.vmem [shape: f32[32,1], index: 3, kind: input, shape index: {}]
  %s4 = inlined_call_operand.vmem [shape: f32[32,1], index: 4, kind: input, shape index: {}]
  %s5 = inlined_call_operand.vmem [shape: bf16[32,32], index: 5, kind: output, shape index: {}]
  %s6 = sld [smem:[#allocation0]]
  $region30: #{discriminator_forward.6} parent=0
    _
  %s8 = ssub.s32 1, %s6
  %s9 = scalar_select 0, %s8, %s6
  // Predicated region
  $region2: #{discriminator_forward.6} parent=0 // pred_check
    _
  $region3: #{discriminator_forward.6} parent=0 // pred_check_branch
    %11 = sbr.rel (0) target = $region5
  $region4: #{discriminator_forward.6} parent=0 // pred_region
    _
  $region5: #{discriminator_forward.6} parent=0 // pred_fallthru
    _
  // Predicated region
  $region6: #{discriminator_forward.6} parent=0 // pred_check
    _
  $region7: #{discriminator_forward.6} parent=0 // pred_check_branch
    %13 = sbr.rel (0) target = $region9
  $region8: #{discriminator_forward.6} parent=0 // pred_region
    _
  $region9: #{discriminator_forward.6} parent=0 // pred_fallthru
    _
  // Predicated region
  $region10: #{discriminator_forward.6} parent=0 // pred_check
    _
  $region11: #{discriminator_forward.6} parent=0 // pred_check_branch
    %15 = sbr.rel (0) target = $region13
  $region12: #{discriminator_forward.6} parent=0 // pred_region
    _
  $region13: #{discriminator_forward.6} parent=0 // pred_fallthru
    _
  // Predicated region
  $region14: #{discriminator_forward.6} parent=0 // pred_check
    _
  $region15: #{discriminator_forward.6} parent=0 // pred_check_branch
    %17 = sbr.rel (0) target = $region17
  $region16: #{discriminator_forward.6} parent=0 // pred_region
    _
  $region17: #{discriminator_forward.6} parent=0 // pred_fallthru
    _
  // Predicated region
  $region18: #{discriminator_forward.6} parent=0 // pred_check
    _
  $region19: #{discriminator_forward.6} parent=0 // pred_check_branch
    %19 = sbr.rel (0) target = $region21
  $region20: #{discriminator_forward.6} parent=0 // pred_region
    _
  $region21: #{discriminator_forward.6} parent=0 // pred_fallthru
    _
  %v21 = vld [vmem:[%s0] sm:$0xff]
  %v22 = vld [vmem:[%s0 + $0x8] sm:$0xff]
  %v23 = vld [vmem:[%s0 + $0x10] sm:$0xff]
  %v24 = vld [vmem:[%s0 + $0x18] sm:$0xff]
  %v25 = vld [vmem:[%s1] sm:$0xf]
  %v26 = vld [vmem:[%s1 + $0x4] sm:$0xf]
  %v27 = vld [vmem:[%s1 + $0x8] sm:$0xf]
  %v28 = vld [vmem:[%s1 + $0xc] sm:$0xf]
  %v29 = vld [vmem:[%s1 + $0x10] sm:$0xf]
  %v30 = vld [vmem:[%s1 + $0x14] sm:$0xf]
  %v31 = vld [vmem:[%s1 + $0x18] sm:$0xf]
  %v32 = vld [vmem:[%s1 + $0x1c] sm:$0xf]
  %v33 = vld [vmem:[%s1 + $0x20] sm:$0xf]
  %v34 = vld [vmem:[%s1 + $0x24] sm:$0xf]
  %v35 = vld [vmem:[%s1 + $0x28] sm:$0xf]
  %v36 = vld [vmem:[%s1 + $0x2c] sm:$0xf]
  %v37 = vld [vmem:[%s1 + $0x30] sm:$0xf]
  %v38 = vld [vmem:[%s1 + $0x34] sm:$0xf]
  %v39 = vld [vmem:[%s1 + $0x38] sm:$0xf]
  %v40 = vld [vmem:[%s1 + $0x3c] sm:$0xf]
  %v41 = vld [vmem:[%s1 + $0x40] sm:$0xf]
  %v42 = vld [vmem:[%s1 + $0x44] sm:$0xf]
  %v43 = vld [vmem:[%s1 + $0x48] sm:$0xf]
  %v44 = vld [vmem:[%s1 + $0x4c] sm:$0xf]
  %v45 = vld [vmem:[%s1 + $0x50] sm:$0xf]
  %v46 = vld [vmem:[%s1 + $0x54] sm:$0xf]
  %v47 = vld [vmem:[%s1 + $0x58] sm:$0xf]
  %v48 = vld [vmem:[%s1 + $0x5c] sm:$0xf]
  %v49 = vld [vmem:[%s1 + $0x60] sm:$0xf]
  %v50 = vld [vmem:[%s1 + $0x64] sm:$0xf]
  %v51 = vld [vmem:[%s1 + $0x68] sm:$0xf]
  %v52 = vld [vmem:[%s1 + $0x6c] sm:$0xf]
  %v53 = vld [vmem:[%s1 + $0x70] sm:$0xf]
  %v54 = vld [vmem:[%s1 + $0x74] sm:$0xf]
  %v55 = vld [vmem:[%s1 + $0x78] sm:$0xf]
  %v56 = vld [vmem:[%s1 + $0x7c] sm:$0xf]
  %v57 = vld [vmem:[%s2] sm:$0xff]
  %v58 = vld [vmem:[%s2 + $0x8] sm:$0xff]
  %v59 = vld [vmem:[%s2 + $0x10] sm:$0xff]
  %v60 = vld [vmem:[%s2 + $0x18] sm:$0xff]
  %62 = vset.pattern.permute.xlu0 0
  %63 = vperm.xlu0 %62, %v57
  %v64 = vpop.permute.xlu0 %63
  %67 = vset.pattern.permute.xlu0 0
  %68 = vperm.xlu0 %67, %v58
  %v69 = vpop.permute.xlu0 %68
  %72 = vset.pattern.permute.xlu0 0
  %73 = vperm.xlu0 %72, %v59
  %v74 = vpop.permute.xlu0 %73
  %77 = vset.pattern.permute.xlu0 0
  %78 = vperm.xlu0 %77, %v60
  %v79 = vpop.permute.xlu0 %78
  %v85 = vunpack.c.l.b16 %v21
  %v86 = vunpack.c.h.b16 %v21
  %v87 = vunpack.c.l.b16 %v22
  %v88 = vunpack.c.h.b16 %v22
  %v89 = vunpack.c.l.b16 %v23
  %v90 = vunpack.c.h.b16 %v23
  %v91 = vunpack.c.l.b16 %v24
  %v92 = vunpack.c.h.b16 %v24
  %v93 = vpack.c.b16 %v87, %v85
  %v94 = vpack.c.b16 %v88, %v86
  %v95 = vpack.c.b16 %v91, %v89
  %v96 = vpack.c.b16 %v92, %v90
  %v133 = vunpack.c.l.b16 %v25
  %v134 = vunpack.c.l.b16 %v26
  %v135 = vunpack.c.l.b16 %v27
  %v136 = vunpack.c.l.b16 %v28
  %v137 = vunpack.c.l.b16 %v29
  %v138 = vunpack.c.l.b16 %v30
  %v139 = vunpack.c.l.b16 %v31
  %v140 = vunpack.c.l.b16 %v32
  %v141 = vunpack.c.l.b16 %v33
  %v142 = vunpack.c.l.b16 %v34
  %v143 = vunpack.c.l.b16 %v35
  %v144 = vunpack.c.l.b16 %v36
  %v145 = vunpack.c.l.b16 %v37
  %v146 = vunpack.c.l.b16 %v38
  %v147 = vunpack.c.l.b16 %v39
  %v148 = vunpack.c.l.b16 %v40
  %v149 = vunpack.c.l.b16 %v41
  %v150 = vunpack.c.l.b16 %v42
  %v151 = vunpack.c.l.b16 %v43
  %v152 = vunpack.c.l.b16 %v44
  %v153 = vunpack.c.l.b16 %v45
  %v154 = vunpack.c.l.b16 %v46
  %v155 = vunpack.c.l.b16 %v47
  %v156 = vunpack.c.l.b16 %v48
  %v157 = vunpack.c.l.b16 %v49
  %v158 = vunpack.c.l.b16 %v50
  %v159 = vunpack.c.l.b16 %v51
  %v160 = vunpack.c.l.b16 %v52
  %v161 = vunpack.c.l.b16 %v53
  %v162 = vunpack.c.l.b16 %v54
  %v163 = vunpack.c.l.b16 %v55
  %v164 = vunpack.c.l.b16 %v56
  %v165 = vpack.c.b16 %v134, %v133
  %v166 = vpack.c.b16 %v136, %v135
  %v167 = vpack.c.b16 %v138, %v137
  %v168 = vpack.c.b16 %v140, %v139
  %v169 = vpack.c.b16 %v142, %v141
  %v170 = vpack.c.b16 %v144, %v143
  %v171 = vpack.c.b16 %v146, %v145
  %v172 = vpack.c.b16 %v148, %v147
  %v173 = vpack.c.b16 %v150, %v149
  %v174 = vpack.c.b16 %v152, %v151
  %v175 = vpack.c.b16 %v154, %v153
  %v176 = vpack.c.b16 %v156, %v155
  %v177 = vpack.c.b16 %v158, %v157
  %v178 = vpack.c.b16 %v160, %v159
  %v179 = vpack.c.b16 %v162, %v161
  %v180 = vpack.c.b16 %v164, %v163
  %197 = vmatprep.subr.bf16.mxu0 0
  %198 = vmatpush1.bf16.msra.mxu0 %v165
  %199 = vmatprep.subr.bf16.mxu0 0
  %200 = vmatpush1.bf16.msra.mxu0 %v166
  %201 = vmatprep.subr.bf16.mxu0 0
  %202 = vmatpush1.bf16.msra.mxu0 %v167
  %203 = vmatprep.subr.bf16.mxu0 0
  %204 = vmatpush1.bf16.msra.mxu0 %v168
  %205 = vmatprep.subr.bf16.mxu0 0
  %206 = vmatpush1.bf16.msra.mxu0 %v169
  %207 = vmatprep.subr.bf16.mxu0 0
  %208 = vmatpush1.bf16.msra.mxu0 %v170
  %209 = vmatprep.subr.bf16.mxu0 0
  %210 = vmatpush1.bf16.msra.mxu0 %v171
  %211 = vmatprep.subr.bf16.mxu0 0
  %212 = vmatpush1.bf16.msra.mxu0 %v172
  %213 = vmatprep.subr.bf16.mxu0 0
  %214 = vmatpush1.bf16.msra.mxu0 %v173
  %215 = vmatprep.subr.bf16.mxu0 0
  %216 = vmatpush1.bf16.msra.mxu0 %v174
  %217 = vmatprep.subr.bf16.mxu0 0
  %218 = vmatpush1.bf16.msra.mxu0 %v175
  %219 = vmatprep.subr.bf16.mxu0 0
  %220 = vmatpush1.bf16.msra.mxu0 %v176
  %221 = vmatprep.subr.bf16.mxu0 0
  %222 = vmatpush1.bf16.msra.mxu0 %v177
  %223 = vmatprep.subr.bf16.mxu0 0
  %224 = vmatpush1.bf16.msra.mxu0 %v178
  %225 = vmatprep.subr.bf16.mxu0 0
  %226 = vmatpush1.bf16.msra.mxu0 %v179
  %227 = vmatprep.subr.bf16.mxu0 0
  %228 = vmatpush1.bf16.msra.mxu0 %v180
  %229 = vmatprep.mubr.bf16.mxu0 %v94
  %230 = vmatmul.mubr.bf16.gmra.mrb[0].mxu0 %v93
  %v231 = vpop.f32.mrb[0].mxu0
  %v232 = vadd.f32 %v64, %v231
  %v233 = vpop.f32.mrb[0].mxu0
  %v234 = vpop.f32.mrb[0].mxu0
  %v235 = vadd.f32 %v69, %v234
  %v236 = vpop.f32.mrb[0].mxu0
  %237 = vmatprep.mubr.bf16.mxu0 %v96
  %238 = vmatmul.mubr.bf16.gmra.mrb[0].mxu0 %v95
  %v239 = vpop.f32.mrb[0].mxu0
  %v240 = vadd.f32 %v74, %v239
  %v241 = vpop.f32.mrb[0].mxu0
  %v242 = vpop.f32.mrb[0].mxu0
  %v243 = vadd.f32 %v79, %v242
  %v244 = vpop.f32.mrb[0].mxu0
  %245 = vdwg.mxu0
  %vm246 = vcmask 261120
  %v247 = vsel %vm246, %v232, 0.0
  %248 = vadd.xlane.f32.xlu0 %v247
  %v249 = vpop.xlane.xlu0 %248
  %v250 = vsel %vm246, %v235, 0.0
  %251 = vadd.xlane.f32.xlu0 %v250
  %v252 = vpop.xlane.xlu0 %251
  %v253 = vsel %vm246, %v240, 0.0
  %254 = vadd.xlane.f32.xlu0 %v253
  %v255 = vpop.xlane.xlu0 %254
  %v256 = vsel %vm246, %v243, 0.0
  %257 = vadd.xlane.f32.xlu0 %v256
  %v258 = vpop.xlane.xlu0 %257
  %v259 = vmul.f32 %v249, 0.03125
  %v260 = vmul.f32 %v252, 0.03125
  %v261 = vmul.f32 %v255, 0.03125
  %v262 = vmul.f32 %v258, 0.03125
  %v263 = vmul.f32 %v232, %v232
  %v264 = vmul.f32 %v235, %v235
  %v265 = vmul.f32 %v240, %v240
  %v266 = vmul.f32 %v243, %v243
  %v267 = vsel %vm246, %v263, 0.0
  %268 = vadd.xlane.f32.xlu0 %v267
  %v269 = vpop.xlane.xlu0 %268
  %v270 = vsel %vm246, %v264, 0.0
  %271 = vadd.xlane.f32.xlu0 %v270
  %v272 = vpop.xlane.xlu0 %271
  %v273 = vsel %vm246, %v265, 0.0
  %274 = vadd.xlane.f32.xlu0 %v273
  %v275 = vpop.xlane.xlu0 %274
  %v276 = vsel %vm246, %v266, 0.0
  %277 = vadd.xlane.f32.xlu0 %v276
  %v278 = vpop.xlane.xlu0 %277
  %v279 = vmul.f32 %v269, 0.03125
  %v280 = vmul.f32 %v272, 0.03125
  %v281 = vmul.f32 %v275, 0.03125
  %v282 = vmul.f32 %v278, 0.03125
  %v283 = vmul.f32 %v259, %v259
  %v284 = vmul.f32 %v260, %v260
  %v285 = vmul.f32 %v261, %v261
  %v286 = vmul.f32 %v262, %v262
  %v287 = vsub.f32 %v279, %v283
  %v288 = vsub.f32 %v280, %v284
  %v289 = vsub.f32 %v281, %v285
  %v290 = vsub.f32 %v282, %v286
  %v291 = vmax.f32 %v287, 0.0
  %v292 = vmax.f32 %v288, 0.0
  %v293 = vmax.f32 %v289, 0.0
  %v294 = vmax.f32 %v290, 0.0
  %v295 = vsub.f32 %v232, %v259
  %v296 = vsub.f32 %v235, %v260
  %v297 = vsub.f32 %v240, %v261
  %v298 = vsub.f32 %v243, %v262
  %v299 = vadd.f32 %v291, 1e-05
  %v300 = vadd.f32 %v292, 1e-05
  %v301 = vadd.f32 %v293, 1e-05
  %v302 = vadd.f32 %v294, 1e-05
  %v303 = vrsqrt.pop %v299
  %v304 = vrsqrt.pop %v300
  %v305 = vrsqrt.pop %v301
  %v306 = vrsqrt.pop %v302
  %v307 = vmul.f32 %v295, %v303
  %v308 = vmul.f32 %v296, %v304
  %v309 = vmul.f32 %v297, %v305
  %v310 = vmul.f32 %v298, %v306
  %v311 = vld [vmem:[%s3] sm:$0xff]
  %v312 = vld [vmem:[%s3 + $0x8] sm:$0xff]
  %v313 = vld [vmem:[%s3 + $0x10] sm:$0xff]
  %v314 = vld [vmem:[%s3 + $0x18] sm:$0xff]
  %316 = vset.pattern.permute.xlu0 0
  %317 = vperm.xlu0 %316, %v311
  %v318 = vpop.permute.xlu0 %317
  %321 = vset.pattern.permute.xlu0 0
  %322 = vperm.xlu0 %321, %v312
  %v323 = vpop.permute.xlu0 %322
  %326 = vset.pattern.permute.xlu0 0
  %327 = vperm.xlu0 %326, %v313
  %v328 = vpop.permute.xlu0 %327
  %331 = vset.pattern.permute.xlu0 0
  %332 = vperm.xlu0 %331, %v314
  %v333 = vpop.permute.xlu0 %332
  %v335 = vmul.f32 %v307, %v318
  %v336 = vmul.f32 %v308, %v323
  %v337 = vmul.f32 %v309, %v328
  %v338 = vmul.f32 %v310, %v333
  %v339 = vld [vmem:[%s4] sm:$0xff]
  %v340 = vld [vmem:[%s4 + $0x8] sm:$0xff]
  %v341 = vld [vmem:[%s4 + $0x10] sm:$0xff]
  %v342 = vld [vmem:[%s4 + $0x18] sm:$0xff]
  %344 = vset.pattern.permute.xlu0 0
  %345 = vperm.xlu0 %344, %v339
  %v346 = vpop.permute.xlu0 %345
  %349 = vset.pattern.permute.xlu0 0
  %350 = vperm.xlu0 %349, %v340
  %v351 = vpop.permute.xlu0 %350
  %354 = vset.pattern.permute.xlu0 0
  %355 = vperm.xlu0 %354, %v341
  %v356 = vpop.permute.xlu0 %355
  %359 = vset.pattern.permute.xlu0 0
  %360 = vperm.xlu0 %359, %v342
  %v361 = vpop.permute.xlu0 %360
  %v363 = vadd.f32 %v335, %v346
  %v364 = vadd.f32 %v336, %v351
  %v365 = vadd.f32 %v337, %v356
  %v366 = vadd.f32 %v338, %v361
  %vm367 = vcmp.ge.f32.partialorder %v363, 0.0
  %vm368 = vcmp.ge.f32.partialorder %v364, 0.0
  %vm369 = vcmp.ge.f32.partialorder %v365, 0.0
  %vm370 = vcmp.ge.f32.partialorder %v366, 0.0
  %v371 = vmul.f32 %v363, 0.05
  %v372 = vmul.f32 %v364, 0.05
  %v373 = vmul.f32 %v365, 0.05
  %v374 = vmul.f32 %v366, 0.05
  %v375 = vsel %vm367, %v363, %v371
  %v376 = vsel %vm368, %v364, %v372
  %v377 = vsel %vm369, %v365, %v373
  %v378 = vsel %vm370, %v366, %v374
  %v379 = vpack.c.bf16 %v376, %v375
  %v380 = vpack.c.bf16 %v378, %v377
  %v383 = vunpack.c.l.b16 %v379
  %v384 = vunpack.c.h.b16 %v379
  %v385 = vunpack.c.l.b16 %v380
  %v386 = vunpack.c.h.b16 %v380
  %v387 = vpack.c.b16 %v383, %v383
  %v388 = vpack.c.b16 %v384, %v384
  %v389 = vpack.c.b16 %v385, %v385
  %v390 = vpack.c.b16 %v386, %v386
  %vm395 = vcmask 257024
  %396 = vst.msk [vmem:[%s5] sm:$0xf] %vm395, %v387
  %397 = vst.msk [vmem:[%s5 + $0x4] sm:$0xf] %vm395, %v388
  %398 = vst.msk [vmem:[%s5 + $0x8] sm:$0xf] %vm395, %v389
  %399 = vst.msk [vmem:[%s5 + $0xc] sm:$0xf] %vm395, %v390
  // Predicated region
  $region22: #{discriminator_forward.6} parent=0 // pred_check
    _
  $region23: #{discriminator_forward.6} parent=0 // pred_check_branch
    %401 = sbr.rel (0) target = $region25
  $region24: #{discriminator_forward.6} parent=0 // pred_region
    _
  $region25: #{discriminator_forward.6} parent=0 // pred_fallthru
    _
  // Predicated region
  $region26: #{discriminator_forward.6} parent=0 // pred_check
    _
  $region27: #{discriminator_forward.6} parent=0 // pred_check_branch
    %403 = sbr.rel (0) target = $region29
  $region28: #{discriminator_forward.6} parent=0 // pred_region
    _
  $region29: #{discriminator_forward.6} parent=0 // pred_fallthru
    _

// kernel: discriminator_forward.7
$region0: #{discriminator_forward.7}
  #allocation0 [shape = 'u32[]', space=smem, size = 0x4, offset = 0x4, fixed_abs, tag = 'smem constant byte address 0x4 - core index']
  #allocation1 [shape = 'u32[144,128]{1,0:T(1,128)}', space=vmem, size = 0x12000, scoped, tag = 'internal scratch']
  %s0 = inlined_call_operand.vmem [shape: bf16[64,512], index: 0, kind: input, shape index: {}]
  %s1 = inlined_call_operand.vmem [shape: bf16[512,8], index: 1, kind: input, shape index: {}]
  %s2 = inlined_call_operand.vmem [shape: f32[64,1], index: 2, kind: input, shape index: {}]
  %s3 = inlined_call_operand.vmem [shape: f32[64,1], index: 3, kind: input, shape index: {}]
  %s4 = inlined_call_operand.vmem [shape: f32[64,1], index: 4, kind: input, shape index: {}]
  %s5 = inlined_call_operand.vmem [shape: bf16[64,8], index: 5, kind: output, shape index: {}]
  %s6 = sld [smem:[#allocation0]]
  $region30: #{discriminator_forward.7} parent=0
    _
  %s8 = ssub.s32 1, %s6
  %s9 = scalar_select 0, %s8, %s6
  // Predicated region
  $region2: #{discriminator_forward.7} parent=0 // pred_check
    _
  $region3: #{discriminator_forward.7} parent=0 // pred_check_branch
    %11 = sbr.rel (0) target = $region5
  $region4: #{discriminator_forward.7} parent=0 // pred_region
    _
  $region5: #{discriminator_forward.7} parent=0 // pred_fallthru
    _
  // Predicated region
  $region6: #{discriminator_forward.7} parent=0 // pred_check
    _
  $region7: #{discriminator_forward.7} parent=0 // pred_check_branch
    %13 = sbr.rel (0) target = $region9
  $region8: #{discriminator_forward.7} parent=0 // pred_region
    _
  $region9: #{discriminator_forward.7} parent=0 // pred_fallthru
    _
  // Predicated region
  $region10: #{discriminator_forward.7} parent=0 // pred_check
    _
  $region11: #{discriminator_forward.7} parent=0 // pred_check_branch
    %15 = sbr.rel (0) target = $region13
  $region12: #{discriminator_forward.7} parent=0 // pred_region
    _
  $region13: #{discriminator_forward.7} parent=0 // pred_fallthru
    _
  // Predicated region
  $region14: #{discriminator_forward.7} parent=0 // pred_check
    _
  $region15: #{discriminator_forward.7} parent=0 // pred_check_branch
    %17 = sbr.rel (0) target = $region17
  $region16: #{discriminator_forward.7} parent=0 // pred_region
    _
  $region17: #{discriminator_forward.7} parent=0 // pred_fallthru
    _
  // Predicated region
  $region18: #{discriminator_forward.7} parent=0 // pred_check
    _
  $region19: #{discriminator_forward.7} parent=0 // pred_check_branch
    %19 = sbr.rel (0) target = $region21
  $region20: #{discriminator_forward.7} parent=0 // pred_region
    _
  $region21: #{discriminator_forward.7} parent=0 // pred_fallthru
    _
  %v21 = vld [vmem:[%s0] sm:$0xff]
  %v22 = vld [vmem:[%s0 + $0x8] sm:$0xff]
  %v23 = vld [vmem:[%s0 + $0x10] sm:$0xff]
  %v24 = vld [vmem:[%s0 + $0x18] sm:$0xff]
  %v25 = vld [vmem:[%s0 + $0x20] sm:$0xff]
  %v26 = vld [vmem:[%s0 + $0x28] sm:$0xff]
  %v27 = vld [vmem:[%s0 + $0x30] sm:$0xff]
  %v28 = vld [vmem:[%s0 + $0x38] sm:$0xff]
  %v29 = vld [vmem:[%s0 + $0x40] sm:$0xff]
  %v30 = vld [vmem:[%s0 + $0x48] sm:$0xff]
  %v31 = vld [vmem:[%s0 + $0x50] sm:$0xff]
  %v32 = vld [vmem:[%s0 + $0x58] sm:$0xff]
  %v33 = vld [vmem:[%s0 + $0x60] sm:$0xff]
  %v34 = vld [vmem:[%s0 + $0x68] sm:$0xff]
  %v35 = vld [vmem:[%s0 + $0x70] sm:$0xff]
  %v36 = vld [vmem:[%s0 + $0x78] sm:$0xff]
  %v37 = vld [vmem:[%s1] sm:$0xf]
  %v38 = vld [vmem:[%s1 + $0x4] sm:$0xf]
  %v39 = vld [vmem:[%s1 + $0x8] sm:$0xf]
  %v40 = vld [vmem:[%s1 + $0xc] sm:$0xf]
  %v41 = vld [vmem:[%s1 + $0x10] sm:$0xf]
  %v42 = vld [vmem:[%s1 + $0x14] sm:$0xf]
  %v43 = vld [vmem:[%s1 + $0x18] sm:$0xf]
  %v44 = vld [vmem:[%s1 + $0x1c] sm:$0xf]
  %v45 = vld [vmem:[%s1 + $0x20] sm:$0xf]
  %v46 = vld [vmem:[%s1 + $0x24] sm:$0xf]
  %v47 = vld [vmem:[%s1 + $0x28] sm:$0xf]
  %v48 = vld [vmem:[%s1 + $0x2c] sm:$0xf]
  %v49 = vld [vmem:[%s1 + $0x30] sm:$0xf]
  %v50 = vld [vmem:[%s1 + $0x34] sm:$0xf]
  %v51 = vld [vmem:[%s1 + $0x38] sm:$0xf]
  %v52 = vld [vmem:[%s1 + $0x3c] sm:$0xf]
  %v53 = vld [vmem:[%s1 + $0x40] sm:$0xf]
  %v54 = vld [vmem:[%s1 + $0x44] sm:$0xf]
  %v55 = vld [vmem:[%s1 + $0x48] sm:$0xf]
  %v56 = vld [vmem:[%s1 + $0x4c] sm:$0xf]
  %v57 = vld [vmem:[%s1 + $0x50] sm:$0xf]
  %v58 = vld [vmem:[%s1 + $0x54] sm:$0xf]
  %v59 = vld [vmem:[%s1 + $0x58] sm:$0xf]
  %v60 = vld [vmem:[%s1 + $0x5c] sm:$0xf]
  %v61 = vld [vmem:[%s1 + $0x60] sm:$0xf]
  %v62 = vld [vmem:[%s1 + $0x64] sm:$0xf]
  %v63 = vld [vmem:[%s1 + $0x68] sm:$0xf]
  %v64 = vld [vmem:[%s1 + $0x6c] sm:$0xf]
  %v65 = vld [vmem:[%s1 + $0x70] sm:$0xf]
  %v66 = vld [vmem:[%s1 + $0x74] sm:$0xf]
  %v67 = vld [vmem:[%s1 + $0x78] sm:$0xf]
  %v68 = vld [vmem:[%s1 + $0x7c] sm:$0xf]
  %v69 = vld [vmem:[%s1 + $0x80] sm:$0xf]
  %v70 = vld [vmem:[%s1 + $0x84] sm:$0xf]
  %v71 = vld [vmem:[%s1 + $0x88] sm:$0xf]
  %v72 = vld [vmem:[%s1 + $0x8c] sm:$0xf]
  %v73 = vld [vmem:[%s1 + $0x90] sm:$0xf]
  %v74 = vld [vmem:[%s1 + $0x94] sm:$0xf]
  %v75 = vld [vmem:[%s1 + $0x98] sm:$0xf]
  %v76 = vld [vmem:[%s1 + $0x9c] sm:$0xf]
  %v77 = vld [vmem:[%s1 + $0xa0] sm:$0xf]
  %v78 = vld [vmem:[%s1 + $0xa4] sm:$0xf]
  %v79 = vld [vmem:[%s1 + $0xa8] sm:$0xf]
  %v80 = vld [vmem:[%s1 + $0xac] sm:$0xf]
  %v81 = vld [vmem:[%s1 + $0xb0] sm:$0xf]
  %v82 = vld [vmem:[%s1 + $0xb4] sm:$0xf]
  %v83 = vld [vmem:[%s1 + $0xb8] sm:$0xf]
  %v84 = vld [vmem:[%s1 + $0xbc] sm:$0xf]
  %v85 = vld [vmem:[%s1 + $0xc0] sm:$0xf]
  %v86 = vld [vmem:[%s1 + $0xc4] sm:$0xf]
  %v87 = vld [vmem:[%s1 + $0xc8] sm:$0xf]
  %v88 = vld [vmem:[%s1 + $0xcc] sm:$0xf]
  %v89 = vld [vmem:[%s1 + $0xd0] sm:$0xf]
  %v90 = vld [vmem:[%s1 + $0xd4] sm:$0xf]
  %v91 = vld [vmem:[%s1 + $0xd8] sm:$0xf]
  %v92 = vld [vmem:[%s1 + $0xdc] sm:$0xf]
  %v93 = vld [vmem:[%s1 + $0xe0] sm:$0xf]
  %v94 = vld [vmem:[%s1 + $0xe4] sm:$0xf]
  %v95 = vld [vmem:[%s1 + $0xe8] sm:$0xf]
  %v96 = vld [vmem:[%s1 + $0xec] sm:$0xf]
  %v97 = vld [vmem:[%s1 + $0xf0] sm:$0xf]
  %v98 = vld [vmem:[%s1 + $0xf4] sm:$0xf]
  %v99 = vld [vmem:[%s1 + $0xf8] sm:$0xf]
  %v100 = vld [vmem:[%s1 + $0xfc] sm:$0xf]
  %v101 = vld [vmem:[%s2] sm:$0xff]
  %v102 = vld [vmem:[%s2 + $0x8] sm:$0xff]
  %v103 = vld [vmem:[%s2 + $0x10] sm:$0xff]
  %v104 = vld [vmem:[%s2 + $0x18] sm:$0xff]
  %v105 = vld [vmem:[%s2 + $0x20] sm:$0xff]
  %v106 = vld [vmem:[%s2 + $0x28] sm:$0xff]
  %v107 = vld [vmem:[%s2 + $0x30] sm:$0xff]
  %v108 = vld [vmem:[%s2 + $0x38] sm:$0xff]
  %110 = vset.pattern.permute.xlu0 0
  %111 = vperm.xlu0 %110, %v101
  %v112 = vpop.permute.xlu0 %111
  %115 = vset.pattern.permute.xlu0 0
  %116 = vperm.xlu0 %115, %v102
  %v117 = vpop.permute.xlu0 %116
  %120 = vset.pattern.permute.xlu0 0
  %121 = vperm.xlu0 %120, %v103
  %v122 = vpop.permute.xlu0 %121
  %125 = vset.pattern.permute.xlu0 0
  %126 = vperm.xlu0 %125, %v104
  %v127 = vpop.permute.xlu0 %126
  %130 = vset.pattern.permute.xlu0 0
  %131 = vperm.xlu0 %130, %v105
  %v132 = vpop.permute.xlu0 %131
  %135 = vset.pattern.permute.xlu0 0
  %136 = vperm.xlu0 %135, %v106
  %v137 = vpop.permute.xlu0 %136
  %140 = vset.pattern.permute.xlu0 0
  %141 = vperm.xlu0 %140, %v107
  %v142 = vpop.permute.xlu0 %141
  %145 = vset.pattern.permute.xlu0 0
  %146 = vperm.xlu0 %145, %v108
  %v147 = vpop.permute.xlu0 %146
  %v165 = vunpack.c.l.b16 %v21
  %v166 = vunpack.c.h.b16 %v21
  %v167 = vunpack.c.l.b16 %v22
  %v168 = vunpack.c.h.b16 %v22
  %v169 = vunpack.c.l.b16 %v23
  %v170 = vunpack.c.h.b16 %v23
  %v171 = vunpack.c.l.b16 %v24
  %v172 = vunpack.c.h.b16 %v24
  %v173 = vunpack.c.l.b16 %v25
  %v174 = vunpack.c.h.b16 %v25
  %v175 = vunpack.c.l.b16 %v26
  %v176 = vunpack.c.h.b16 %v26
  %v177 = vunpack.c.l.b16 %v27
  %v178 = vunpack.c.h.b16 %v27
  %v179 = vunpack.c.l.b16 %v28
  %v180 = vunpack.c.h.b16 %v28
  %v181 = vunpack.c.l.b16 %v29
  %v182 = vunpack.c.h.b16 %v29
  %v183 = vunpack.c.l.b16 %v30
  %v184 = vunpack.c.h.b16 %v30
  %v185 = vunpack.c.l.b16 %v31
  %v186 = vunpack.c.h.b16 %v31
  %v187 = vunpack.c.l.b16 %v32
  %v188 = vunpack.c.h.b16 %v32
  %v189 = vunpack.c.l.b16 %v33
  %v190 = vunpack.c.h.b16 %v33
  %v191 = vunpack.c.l.b16 %v34
  %v192 = vunpack.c.h.b16 %v34
  %v193 = vunpack.c.l.b16 %v35
  %v194 = vunpack.c.h.b16 %v35
  %v195 = vunpack.c.l.b16 %v36
  %v196 = vunpack.c.h.b16 %v36
  %v197 = vpack.c.b16 %v169, %v165
  %v198 = vpack.c.b16 %v170, %v166
  %v199 = vpack.c.b16 %v171, %v167
  %v200 = vpack.c.b16 %v172, %v168
  %v201 = vpack.c.b16 %v177, %v173
  %v202 = vpack.c.b16 %v178, %v174
  %v203 = vpack.c.b16 %v179, %v175
  %v204 = vpack.c.b16 %v180, %v176
  %v205 = vpack.c.b16 %v185, %v181
  %v206 = vpack.c.b16 %v186, %v182
  %v207 = vpack.c.b16 %v187, %v183
  %v208 = vpack.c.b16 %v188, %v184
  %v209 = vpack.c.b16 %v193, %v189
  %v210 = vpack.c.b16 %v194, %v190
  %v211 = vpack.c.b16 %v195, %v191
  %v212 = vpack.c.b16 %v196, %v192
  %v293 = vunpack.c.l.b16 %v37
  %v294 = vunpack.c.l.b16 %v38
  %v295 = vunpack.c.l.b16 %v39
  %v296 = vunpack.c.l.b16 %v40
  %v297 = vunpack.c.l.b16 %v41
  %v298 = vunpack.c.l.b16 %v42
  %v299 = vunpack.c.l.b16 %v43
  %v300 = vunpack.c.l.b16 %v44
  %v301 = vunpack.c.l.b16 %v45
  %v302 = vunpack.c.l.b16 %v46
  %v303 = vunpack.c.l.b16 %v47
  %v304 = vunpack.c.l.b16 %v48
  %v305 = vunpack.c.l.b16 %v49
  %v306 = vunpack.c.l.b16 %v50
  %v307 = vunpack.c.l.b16 %v51
  %v308 = vunpack.c.l.b16 %v52
  %v309 = vunpack.c.l.b16 %v53
  %v310 = vunpack.c.l.b16 %v54
  %v311 = vunpack.c.l.b16 %v55
  %v312 = vunpack.c.l.b16 %v56
  %v313 = vunpack.c.l.b16 %v57
  %v314 = vunpack.c.l.b16 %v58
  %v315 = vunpack.c.l.b16 %v59
  %v316 = vunpack.c.l.b16 %v60
  %v317 = vunpack.c.l.b16 %v61
  %v318 = vunpack.c.l.b16 %v62
  %v319 = vunpack.c.l.b16 %v63
  %v320 = vunpack.c.l.b16 %v64
  %v321 = vunpack.c.l.b16 %v65
  %v322 = vunpack.c.l.b16 %v66
  %v323 = vunpack.c.l.b16 %v67
  %v324 = vunpack.c.l.b16 %v68
  %v325 = vunpack.c.l.b16 %v69
  %v326 = vunpack.c.l.b16 %v70
  %v327 = vunpack.c.l.b16 %v71
  %v328 = vunpack.c.l.b16 %v72
  %v329 = vunpack.c.l.b16 %v73
  %v330 = vunpack.c.l.b16 %v74
  %v331 = vunpack.c.l.b16 %v75
  %v332 = vunpack.c.l.b16 %v76
  %v333 = vunpack.c.l.b16 %v77
  %v334 = vunpack.c.l.b16 %v78
  %v335 = vunpack.c.l.b16 %v79
  %v336 = vunpack.c.l.b16 %v80
  %v337 = vunpack.c.l.b16 %v81
  %v338 = vunpack.c.l.b16 %v82
  %v339 = vunpack.c.l.b16 %v83
  %v340 = vunpack.c.l.b16 %v84
  %v341 = vunpack.c.l.b16 %v85
  %v342 = vunpack.c.l.b16 %v86
  %v343 = vunpack.c.l.b16 %v87
  %v344 = vunpack.c.l.b16 %v88
  %v345 = vunpack.c.l.b16 %v89
  %v346 = vunpack.c.l.b16 %v90
  %v347 = vunpack.c.l.b16 %v91
  %v348 = vunpack.c.l.b16 %v92
  %v349 = vunpack.c.l.b16 %v93
  %v350 = vunpack.c.l.b16 %v94
  %v351 = vunpack.c.l.b16 %v95
  %v352 = vunpack.c.l.b16 %v96
  %v353 = vunpack.c.l.b16 %v97
  %v354 = vunpack.c.l.b16 %v98
  %v355 = vunpack.c.l.b16 %v99
  %v356 = vunpack.c.l.b16 %v100
  %v357 = vpack.c.b16 %v294, %v293
  %v358 = vpack.c.b16 %v296, %v295
  %v359 = vpack.c.b16 %v298, %v297
  %v360 = vpack.c.b16 %v300, %v299
  %v361 = vpack.c.b16 %v302, %v301
  %v362 = vpack.c.b16 %v304, %v303
  %v363 = vpack.c.b16 %v306, %v305
  %v364 = vpack.c.b16 %v308, %v307
  %v365 = vpack.c.b16 %v310, %v309
  %v366 = vpack.c.b16 %v312, %v311
  %v367 = vpack.c.b16 %v314, %v313
  %v368 = vpack.c.b16 %v316, %v315
  %v369 = vpack.c.b16 %v318, %v317
  %v370 = vpack.c.b16 %v320, %v319
  %v371 = vpack.c.b16 %v322, %v321
  %v372 = vpack.c.b16 %v324, %v323
  %v373 = vpack.c.b16 %v326, %v325
  %v374 = vpack.c.b16 %v328, %v327
  %v375 = vpack.c.b16 %v330, %v329
  %v376 = vpack.c.b16 %v332, %v331
  %v377 = vpack.c.b16 %v334, %v333
  %v378 = vpack.c.b16 %v336, %v335
  %v379 = vpack.c.b16 %v338, %v337
  %v380 = vpack.c.b16 %v340, %v339
  %v381 = vpack.c.b16 %v342, %v341
  %v382 = vpack.c.b16 %v344, %v343
  %v383 = vpack.c.b16 %v346, %v345
  %v384 = vpack.c.b16 %v348, %v347
  %v385 = vpack.c.b16 %v350, %v349
  %v386 = vpack.c.b16 %v352, %v351
  %v387 = vpack.c.b16 %v354, %v353
  %v388 = vpack.c.b16 %v356, %v355
  %421 = vmatprep.subr.bf16.mxu0 0
  %422 = vmatpush1.bf16.msra.mxu0 %v357
  %423 = vmatprep.subr.bf16.mxu0 0
  %424 = vmatpush1.bf16.msra.mxu0 %v358
  %425 = vmatprep.subr.bf16.mxu0 0
  %426 = vmatpush1.bf16.msra.mxu0 %v359
  %427 = vmatprep.subr.bf16.mxu0 0
  %428 = vmatpush1.bf16.msra.mxu0 %v360
  %429 = vmatprep.subr.bf16.mxu0 0
  %430 = vmatpush1.bf16.msra.mxu0 %v361
  %431 = vmatprep.subr.bf16.mxu0 0
  %432 = vmatpush1.bf16.msra.mxu0 %v362
  %433 = vmatprep.subr.bf16.mxu0 0
  %434 = vmatpush1.bf16.msra.mxu0 %v363
  %435 = vmatprep.subr.bf16.mxu0 0
  %436 = vmatpush1.bf16.msra.mxu0 %v364
  %437 = vmatprep.subr.bf16.mxu0 0
  %438 = vmatpush1.bf16.msra.mxu0 %v365
  %439 = vmatprep.subr.bf16.mxu0 0
  %440 = vmatpush1.bf16.msra.mxu0 %v366
  %441 = vmatprep.subr.bf16.mxu0 0
  %442 = vmatpush1.bf16.msra.mxu0 %v367
  %443 = vmatprep.subr.bf16.mxu0 0
  %444 = vmatpush1.bf16.msra.mxu0 %v368
  %445 = vmatprep.subr.bf16.mxu0 0
  %446 = vmatpush1.bf16.msra.mxu0 %v369
  %447 = vmatprep.subr.bf16.mxu0 0
  %448 = vmatpush1.bf16.msra.mxu0 %v370
  %449 = vmatprep.subr.bf16.mxu0 0
  %450 = vmatpush1.bf16.msra.mxu0 %v371
  %451 = vmatprep.subr.bf16.mxu0 0
  %452 = vmatpush1.bf16.msra.mxu0 %v372
  %453 = vmatprep.mubr.bf16.mxu0 %v198
  %454 = vmatmul.mubr.bf16.gmra.mrb[0].mxu0 %v197
  %v455 = vpop.f32.mrb[0].mxu0
  %v456 = vadd.f32 %v112, %v455
  %v457 = vpop.f32.mrb[0].mxu0
  %v458 = vpop.f32.mrb[0].mxu0
  %v459 = vadd.f32 %v117, %v458
  %v460 = vpop.f32.mrb[0].mxu0
  %461 = vmatprep.mubr.bf16.mxu0 %v202
  %462 = vmatmul.mubr.bf16.gmra.mrb[0].mxu0 %v201
  %v463 = vpop.f32.mrb[0].mxu0
  %v464 = vadd.f32 %v122, %v463
  %v465 = vpop.f32.mrb[0].mxu0
  %v466 = vpop.f32.mrb[0].mxu0
  %v467 = vadd.f32 %v127, %v466
  %v468 = vpop.f32.mrb[0].mxu0
  %469 = vmatprep.mubr.bf16.mxu0 %v206
  %470 = vmatmul.mubr.bf16.gmra.mrb[0].mxu0 %v205
  %v471 = vpop.f32.mrb[0].mxu0
  %v472 = vadd.f32 %v132, %v471
  %v473 = vpop.f32.mrb[0].mxu0
  %v474 = vpop.f32.mrb[0].mxu0
  %v475 = vadd.f32 %v137, %v474
  %v476 = vpop.f32.mrb[0].mxu0
  %477 = vmatprep.mubr.bf16.mxu0 %v210
  %478 = vmatmul.mubr.bf16.gmra.mrb[0].mxu0 %v209
  %v479 = vpop.f32.mrb[0].mxu0
  %v480 = vadd.f32 %v142, %v479
  %v481 = vpop.f32.mrb[0].mxu0
  %v482 = vpop.f32.mrb[0].mxu0
  %v483 = vadd.f32 %v147, %v482
  %v484 = vpop.f32.mrb[0].mxu0
  %485 = vdwg.mxu0
  %486 = vmatprep.subr.bf16.mxu0 0
  %487 = vmatpush1.bf16.msra.mxu0 %v373
  %488 = vmatprep.subr.bf16.mxu0 0
  %489 = vmatpush1.bf16.msra.mxu0 %v374
  %490 = vmatprep.subr.bf16.mxu0 0
  %491 = vmatpush1.bf16.msra.mxu0 %v375
  %492 = vmatprep.subr.bf16.mxu0 0
  %493 = vmatpush1.bf16.msra.mxu0 %v376
  %494 = vmatprep.subr.bf16.mxu0 0
  %495 = vmatpush1.bf16.msra.mxu0 %v377
  %496 = vmatprep.subr.bf16.mxu0 0
  %497 = vmatpush1.bf16.msra.mxu0 %v378
  %498 = vmatprep.subr.bf16.mxu0 0
  %499 = vmatpush1.bf16.msra.mxu0 %v379
  %500 = vmatprep.subr.bf16.mxu0 0
  %501 = vmatpush1.bf16.msra.mxu0 %v380
  %502 = vmatprep.subr.bf16.mxu0 0
  %503 = vmatpush1.bf16.msra.mxu0 %v381
  %504 = vmatprep.subr.bf16.mxu0 0
  %505 = vmatpush1.bf16.msra.mxu0 %v382
  %506 = vmatprep.subr.bf16.mxu0 0
  %507 = vmatpush1.bf16.msra.mxu0 %v383
  %508 = vmatprep.subr.bf16.mxu0 0
  %509 = vmatpush1.bf16.msra.mxu0 %v384
  %510 = vmatprep.subr.bf16.mxu0 0
  %511 = vmatpush1.bf16.msra.mxu0 %v385
  %512 = vmatprep.subr.bf16.mxu0 0
  %513 = vmatpush1.bf16.msra.mxu0 %v386
  %514 = vmatprep.subr.bf16.mxu0 0
  %515 = vmatpush1.bf16.msra.mxu0 %v387
  %516 = vmatprep.subr.bf16.mxu0 0
  %517 = vmatpush1.bf16.msra.mxu0 %v388
  %518 = vmatprep.mubr.bf16.mxu0 %v200
  %519 = vmatmul.mubr.bf16.gmra.mrb[0].mxu0 %v199
  %v520 = vpop.f32.mrb[0].mxu0
  %v521 = vadd.f32 %v456, %v520
  %v522 = vpop.f32.mrb[0].mxu0
  %v523 = vpop.f32.mrb[0].mxu0
  %v524 = vadd.f32 %v459, %v523
  %v525 = vpop.f32.mrb[0].mxu0
  %526 = vmatprep.mubr.bf16.mxu0 %v204
  %527 = vmatmul.mubr.bf16.gmra.mrb[0].mxu0 %v203
  %v528 = vpop.f32.mrb[0].mxu0
  %v529 = vadd.f32 %v464, %v528
  %v530 = vpop.f32.mrb[0].mxu0
  %v531 = vpop.f32.mrb[0].mxu0
  %v532 = vadd.f32 %v467, %v531
  %v533 = vpop.f32.mrb[0].mxu0
  %534 = vmatprep.mubr.bf16.mxu0 %v208
  %535 = vmatmul.mubr.bf16.gmra.mrb[0].mxu0 %v207
  %v536 = vpop.f32.mrb[0].mxu0
  %v537 = vadd.f32 %v472, %v536
  %v538 = vpop.f32.mrb[0].mxu0
  %v539 = vpop.f32.mrb[0].mxu0
  %v540 = vadd.f32 %v475, %v539
  %v541 = vpop.f32.mrb[0].mxu0
  %542 = vmatprep.mubr.bf16.mxu0 %v212
  %543 = vmatmul.mubr.bf16.gmra.mrb[0].mxu0 %v211
  %v544 = vpop.f32.mrb[0].mxu0
  %v545 = vadd.f32 %v480, %v544
  %v546 = vpop.f32.mrb[0].mxu0
  %v547 = vpop.f32.mrb[0].mxu0
  %v548 = vadd.f32 %v483, %v547
  %v549 = vpop.f32.mrb[0].mxu0
  %550 = vdwg.mxu0
  %vm551 = vcmask 64512
  %v552 = vsel %vm551, %v521, 0.0
  %553 = vadd.xlane.f32.xlu0 %v552
  %v554 = vpop.xlane.xlu0 %553
  %v555 = vsel %vm551, %v524, 0.0
  %556 = vadd.xlane.f32.xlu0 %v555
  %v557 = vpop.xlane.xlu0 %556
  %v558 = vsel %vm551, %v529, 0.0
  %559 = vadd.xlane.f32.xlu0 %v558
  %v560 = vpop.xlane.xlu0 %559
  %v561 = vsel %vm551, %v532, 0.0
  %562 = vadd.xlane.f32.xlu0 %v561
  %v563 = vpop.xlane.xlu0 %562
  %v564 = vsel %vm551, %v537, 0.0
  %565 = vadd.xlane.f32.xlu0 %v564
  %v566 = vpop.xlane.xlu0 %565
  %v567 = vsel %vm551, %v540, 0.0
  %568 = vadd.xlane.f32.xlu0 %v567
  %v569 = vpop.xlane.xlu0 %568
  %v570 = vsel %vm551, %v545, 0.0
  %571 = vadd.xlane.f32.xlu0 %v570
  %v572 = vpop.xlane.xlu0 %571
  %v573 = vsel %vm551, %v548, 0.0
  %574 = vadd.xlane.f32.xlu0 %v573
  %v575 = vpop.xlane.xlu0 %574
  %v576 = vmul.f32 %v554, 0.125
  %v577 = vmul.f32 %v557, 0.125
  %v578 = vmul.f32 %v560, 0.125
  %v579 = vmul.f32 %v563, 0.125
  %v580 = vmul.f32 %v566, 0.125
  %v581 = vmul.f32 %v569, 0.125
  %v582 = vmul.f32 %v572, 0.125
  %v583 = vmul.f32 %v575, 0.125
  %v584 = vmul.f32 %v521, %v521
  %v585 = vmul.f32 %v524, %v524
  %v586 = vmul.f32 %v529, %v529
  %v587 = vmul.f32 %v532, %v532
  %v588 = vmul.f32 %v537, %v537
  %v589 = vmul.f32 %v540, %v540
  %v590 = vmul.f32 %v545, %v545
  %v591 = vmul.f32 %v548, %v548
  %v592 = vsel %vm551, %v584, 0.0
  %593 = vadd.xlane.f32.xlu0 %v592
  %v594 = vpop.xlane.xlu0 %593
  %v595 = vsel %vm551, %v585, 0.0
  %596 = vadd.xlane.f32.xlu0 %v595
  %v597 = vpop.xlane.xlu0 %596
  %v598 = vsel %vm551, %v586, 0.0
  %599 = vadd.xlane.f32.xlu0 %v598
  %v600 = vpop.xlane.xlu0 %599
  %v601 = vsel %vm551, %v587, 0.0
  %602 = vadd.xlane.f32.xlu0 %v601
  %v603 = vpop.xlane.xlu0 %602
  %v604 = vsel %vm551, %v588, 0.0
  %605 = vadd.xlane.f32.xlu0 %v604
  %v606 = vpop.xlane.xlu0 %605
  %v607 = vsel %vm551, %v589, 0.0
  %608 = vadd.xlane.f32.xlu0 %v607
  %v609 = vpop.xlane.xlu0 %608
  %v610 = vsel %vm551, %v590, 0.0
  %611 = vadd.xlane.f32.xlu0 %v610
  %v612 = vpop.xlane.xlu0 %611
  %v613 = vsel %vm551, %v591, 0.0
  %614 = vadd.xlane.f32.xlu0 %v613
  %v615 = vpop.xlane.xlu0 %614
  %v616 = vmul.f32 %v594, 0.125
  %v617 = vmul.f32 %v597, 0.125
  %v618 = vmul.f32 %v600, 0.125
  %v619 = vmul.f32 %v603, 0.125
  %v620 = vmul.f32 %v606, 0.125
  %v621 = vmul.f32 %v609, 0.125
  %v622 = vmul.f32 %v612, 0.125
  %v623 = vmul.f32 %v615, 0.125
  %v624 = vmul.f32 %v576, %v576
  %v625 = vmul.f32 %v577, %v577
  %v626 = vmul.f32 %v578, %v578
  %v627 = vmul.f32 %v579, %v579
  %v628 = vmul.f32 %v580, %v580
  %v629 = vmul.f32 %v581, %v581
  %v630 = vmul.f32 %v582, %v582
  %v631 = vmul.f32 %v583, %v583
  %v632 = vsub.f32 %v616, %v624
  %v633 = vsub.f32 %v617, %v625
  %v634 = vsub.f32 %v618, %v626
  %v635 = vsub.f32 %v619, %v627
  %v636 = vsub.f32 %v620, %v628
  %v637 = vsub.f32 %v621, %v629
  %v638 = vsub.f32 %v622, %v630
  %v639 = vsub.f32 %v623, %v631
  %v640 = vmax.f32 %v632, 0.0
  %v641 = vmax.f32 %v633, 0.0
  %v642 = vmax.f32 %v634, 0.0
  %v643 = vmax.f32 %v635, 0.0
  %v644 = vmax.f32 %v636, 0.0
  %v645 = vmax.f32 %v637, 0.0
  %v646 = vmax.f32 %v638, 0.0
  %v647 = vmax.f32 %v639, 0.0
  %v648 = vsub.f32 %v521, %v576
  %v649 = vsub.f32 %v524, %v577
  %v650 = vsub.f32 %v529, %v578
  %v651 = vsub.f32 %v532, %v579
  %v652 = vsub.f32 %v537, %v580
  %v653 = vsub.f32 %v540, %v581
  %v654 = vsub.f32 %v545, %v582
  %v655 = vsub.f32 %v548, %v583
  %v656 = vadd.f32 %v640, 1e-05
  %v657 = vadd.f32 %v641, 1e-05
  %v658 = vadd.f32 %v642, 1e-05
  %v659 = vadd.f32 %v643, 1e-05
  %v660 = vadd.f32 %v644, 1e-05
  %v661 = vadd.f32 %v645, 1e-05
  %v662 = vadd.f32 %v646, 1e-05
  %v663 = vadd.f32 %v647, 1e-05
  %v664 = vrsqrt.pop %v656
  %v665 = vrsqrt.pop %v657
  %v666 = vrsqrt.pop %v658
  %v667 = vrsqrt.pop %v659
  %v668 = vrsqrt.pop %v660
  %v669 = vrsqrt.pop %v661
  %v670 = vrsqrt.pop %v662
  %v671 = vrsqrt.pop %v663
  %v672 = vmul.f32 %v648, %v664
  %v673 = vmul.f32 %v649, %v665
  %v674 = vmul.f32 %v650, %v666
  %v675 = vmul.f32 %v651, %v667
  %v676 = vmul.f32 %v652, %v668
  %v677 = vmul.f32 %v653, %v669
  %v678 = vmul.f32 %v654, %v670
  %v679 = vmul.f32 %v655, %v671
  %v680 = vld [vmem:[%s3] sm:$0xff]
  %v681 = vld [vmem:[%s3 + $0x8] sm:$0xff]
  %v682 = vld [vmem:[%s3 + $0x10] sm:$0xff]
  %v683 = vld [vmem:[%s3 + $0x18] sm:$0xff]
  %v684 = vld [vmem:[%s3 + $0x20] sm:$0xff]
  %v685 = vld [vmem:[%s3 + $0x28] sm:$0xff]
  %v686 = vld [vmem:[%s3 + $0x30] sm:$0xff]
  %v687 = vld [vmem:[%s3 + $0x38] sm:$0xff]
  %689 = vset.pattern.permute.xlu0 0
  %690 = vperm.xlu0 %689, %v680
  %v691 = vpop.permute.xlu0 %690
  %694 = vset.pattern.permute.xlu0 0
  %695 = vperm.xlu0 %694, %v681
  %v696 = vpop.permute.xlu0 %695
  %699 = vset.pattern.permute.xlu0 0
  %700 = vperm.xlu0 %699, %v682
  %v701 = vpop.permute.xlu0 %700
  %704 = vset.pattern.permute.xlu0 0
  %705 = vperm.xlu0 %704, %v683
  %v706 = vpop.permute.xlu0 %705
  %709 = vset.pattern.permute.xlu0 0
  %710 = vperm.xlu0 %709, %v684
  %v711 = vpop.permute.xlu0 %710
  %714 = vset.pattern.permute.xlu0 0
  %715 = vperm.xlu0 %714, %v685
  %v716 = vpop.permute.xlu0 %715
  %719 = vset.pattern.permute.xlu0 0
  %720 = vperm.xlu0 %719, %v686
  %v721 = vpop.permute.xlu0 %720
  %724 = vset.pattern.permute.xlu0 0
  %725 = vperm.xlu0 %724, %v687
  %v726 = vpop.permute.xlu0 %725
  %v728 = vmul.f32 %v672, %v691
  %v729 = vmul.f32 %v673, %v696
  %v730 = vmul.f32 %v674, %v701
  %v731 = vmul.f32 %v675, %v706
  %v732 = vmul.f32 %v676, %v711
  %v733 = vmul.f32 %v677, %v716
  %v734 = vmul.f32 %v678, %v721
  %v735 = vmul.f32 %v679, %v726
  %v736 = vld [vmem:[%s4] sm:$0xff]
  %v737 = vld [vmem:[%s4 + $0x8] sm:$0xff]
  %v738 = vld [vmem:[%s4 + $0x10] sm:$0xff]
  %v739 = vld [vmem:[%s4 + $0x18] sm:$0xff]
  %v740 = vld [vmem:[%s4 + $0x20] sm:$0xff]
  %v741 = vld [vmem:[%s4 + $0x28] sm:$0xff]
  %v742 = vld [vmem:[%s4 + $0x30] sm:$0xff]
  %v743 = vld [vmem:[%s4 + $0x38] sm:$0xff]
  %745 = vset.pattern.permute.xlu0 0
  %746 = vperm.xlu0 %745, %v736
  %v747 = vpop.permute.xlu0 %746
  %750 = vset.pattern.permute.xlu0 0
  %751 = vperm.xlu0 %750, %v737
  %v752 = vpop.permute.xlu0 %751
  %755 = vset.pattern.permute.xlu0 0
  %756 = vperm.xlu0 %755, %v738
  %v757 = vpop.permute.xlu0 %756
  %760 = vset.pattern.permute.xlu0 0
  %761 = vperm.xlu0 %760, %v739
  %v762 = vpop.permute.xlu0 %761
  %765 = vset.pattern.permute.xlu0 0
  %766 = vperm.xlu0 %765, %v740
  %v767 = vpop.permute.xlu0 %766
  %770 = vset.pattern.permute.xlu0 0
  %771 = vperm.xlu0 %770, %v741
  %v772 = vpop.permute.xlu0 %771
  %775 = vset.pattern.permute.xlu0 0
  %776 = vperm.xlu0 %775, %v742
  %v777 = vpop.permute.xlu0 %776
  %780 = vset.pattern.permute.xlu0 0
  %781 = vperm.xlu0 %780, %v743
  %v782 = vpop.permute.xlu0 %781
  %v784 = vadd.f32 %v728, %v747
  %v785 = vadd.f32 %v729, %v752
  %v786 = vadd.f32 %v730, %v757
  %v787 = vadd.f32 %v731, %v762
  %v788 = vadd.f32 %v732, %v767
  %v789 = vadd.f32 %v733, %v772
  %v790 = vadd.f32 %v734, %v777
  %v791 = vadd.f32 %v735, %v782
  %vm792 = vcmp.ge.f32.partialorder %v784, 0.0
  %vm793 = vcmp.ge.f32.partialorder %v785, 0.0
  %vm794 = vcmp.ge.f32.partialorder %v786, 0.0
  %vm795 = vcmp.ge.f32.partialorder %v787, 0.0
  %vm796 = vcmp.ge.f32.partialorder %v788, 0.0
  %vm797 = vcmp.ge.f32.partialorder %v789, 0.0
  %vm798 = vcmp.ge.f32.partialorder %v790, 0.0
  %vm799 = vcmp.ge.f32.partialorder %v791, 0.0
  %v800 = vmul.f32 %v784, 0.05
  %v801 = vmul.f32 %v785, 0.05
  %v802 = vmul.f32 %v786, 0.05
  %v803 = vmul.f32 %v787, 0.05
  %v804 = vmul.f32 %v788, 0.05
  %v805 = vmul.f32 %v789, 0.05
  %v806 = vmul.f32 %v790, 0.05
  %v807 = vmul.f32 %v791, 0.05
  %v808 = vsel %vm792, %v784, %v800
  %v809 = vsel %vm793, %v785, %v801
  %v810 = vsel %vm794, %v786, %v802
  %v811 = vsel %vm795, %v787, %v803
  %v812 = vsel %vm796, %v788, %v804
  %v813 = vsel %vm797, %v789, %v805
  %v814 = vsel %vm798, %v790, %v806
  %v815 = vsel %vm799, %v791, %v807
  %v816 = vpack.c.bf16 %v809, %v808
  %v817 = vpack.c.bf16 %v811, %v810
  %v818 = vpack.c.bf16 %v813, %v812
  %v819 = vpack.c.bf16 %v815, %v814
  %v824 = vunpack.c.l.b16 %v816
  %v825 = vunpack.c.h.b16 %v816
  %v826 = vunpack.c.l.b16 %v817
  %v827 = vunpack.c.h.b16 %v817
  %v828 = vunpack.c.l.b16 %v818
  %v829 = vunpack.c.h.b16 %v818
  %v830 = vunpack.c.l.b16 %v819
  %v831 = vunpack.c.h.b16 %v819
  %v832 = vpack.c.b16 %v824, %v824
  %v833 = vpack.c.b16 %v825, %v825
  %v834 = vpack.c.b16 %v826, %v826
  %v835 = vpack.c.b16 %v827, %v827
  %v836 = vpack.c.b16 %v828, %v828
  %v837 = vpack.c.b16 %v829, %v829
  %v838 = vpack.c.b16 %v830, %v830
  %v839 = vpack.c.b16 %v831, %v831
  %vm848 = vcmask 60416
  %849 = vst.msk [vmem:[%s5] sm:$0xf] %vm848, %v832
  %850 = vst.msk [vmem:[%s5 + $0x4] sm:$0xf] %vm848, %v833
  %851 = vst.msk [vmem:[%s5 + $0x8] sm:$0xf] %vm848, %v834
  %852 = vst.msk [vmem:[%s5 + $0xc] sm:$0xf] %vm848, %v835
  %853 = vst.msk [vmem:[%s5 + $0x10] sm:$0xf] %vm848, %v836
  %854 = vst.msk [vmem:[%s5 + $0x14] sm:$0xf] %vm848, %v837
  %855 = vst.msk [vmem:[%s5 + $0x18] sm:$0xf] %vm848, %v838
  %856 = vst.msk [vmem:[%s5 + $0x1c] sm:$0xf] %vm848, %v839
  // Predicated region
  $region22: #{discriminator_forward.7} parent=0 // pred_check
    _
  $region23: #{discriminator_forward.7} parent=0 // pred_check_branch
    %858 = sbr.rel (0) target = $region25
  $region24: #{discriminator_forward.7} parent=0 // pred_region
    _
  $region25: #{discriminator_forward.7} parent=0 // pred_fallthru
    _
  // Predicated region
  $region26: #{discriminator_forward.7} parent=0 // pred_check
    _
  $region27: #{discriminator_forward.7} parent=0 // pred_check_branch
    %860 = sbr.rel (0) target = $region29
  $region28: #{discriminator_forward.7} parent=0 // pred_region
    _
  $region29: #{discriminator_forward.7} parent=0 // pred_fallthru
    _

</llo_original>
